<compile_context>
chip_gen: v7x
topology: tpu7x:2x2x1
jax: 0.10.0
libtpu: 0.0.40
codegen_flags: <defaults>
</compile_context>

<pallas_src>
import math

import jax
import jax.numpy as jnp
import numpy as np
from jax.experimental import pallas as pl
from jax.experimental.pallas import tpu as pltpu

# ----------------------------- hyper-parameters ------------------------------
MAXLEN = 8          # torch: maxlen
EMBEDDIM = 32       # torch: embeddim
ATTHIDDEN = 16      # torch: atthidden
CHANNELS = 8        # torch: channels
NUMCLASSES = 2
VOCAB = 16
LAMDA = 0.1
FILTERSIZES = (3, 4, 5)
BATCH = 2

OUT_LANES = 128     # lane-dense output / classifier padding
NEG = -1e30         # "-inf" used for validity masking


# ----------------------------- slab packing ----------------------------------
def _pack_slab(groups, lanes=OUT_LANES):
    """Pack small 2-D parameter pieces into one (8,128)-aligned f32 slab.

    `groups` is a list of lists of (name, array): pieces in a group sit
    side-by-side along lanes (total width <= 128); groups stack along rows
    (each group's row extent rounded up to a multiple of 8).
    Returns (slab, {name: (row0, col0, rows, cols)}).
    """
    offs = {}
    total_rows = 0
    for g in groups:
        col = 0
        gmax = 0
        for name, p in g:
            r, c = int(p.shape[0]), int(p.shape[1])
            offs[name] = (total_rows, col, r, c)
            col += c
            gmax = max(gmax, r)
        assert col <= lanes, f"slab group too wide: {col} > {lanes}"
        total_rows += ((gmax + 7) // 8) * 8
    slab = jnp.zeros((total_rows, lanes), jnp.float32)
    for g in groups:
        for name, p in g:
            r0, c0, r, c = offs[name]
            slab = slab.at[r0:r0 + r, c0:c0 + c].set(jnp.asarray(p, jnp.float32))
    return slab, offs


# --------------------------------- kernel ------------------------------------
def _make_abcnn_kernel(BT, L, D, H, C3, VOC, max_fs, wo, co):
    Lm1 = L - 1
    D2 = 2 * D
    LH = Lm1 * H
    Kc = max_fs * D2
    BTL = BT * L

    def piece(ref, off):
        r0, c0, r, c = off
        return ref[r0:r0 + r, c0:c0 + c]

    def kernel(idx_ref, w_ref, c_ref, o_ref):
        # ---- embedding lookup in-kernel: one-hot(idx) @ embedmatrix ---------
        idx = idx_ref[...]                                      # (BTL, 1) int32
        vio = jax.lax.broadcasted_iota(jnp.int32, (BTL, VOC), 1)
        onehot = (idx == vio).astype(jnp.float32)               # (BTL, VOC)
        Ef = jnp.dot(onehot, piece(w_ref, wo['emb']),
                     preferred_element_type=jnp.float32)        # (BTL, D)
        E3 = Ef.reshape(BT, L, D)                               # leading split

        # ---- additive attention on a lane-dense (BTL, Lm1*H) slab -----------
        # query part: replication over the Lm1 key slots is folded into the
        # pre-tiled weight -> one MXU op produces the dense slab.
        A_rep = jnp.dot(Ef, piece(w_ref, wo['w1a']),
                        preferred_element_type=jnp.float32)     # (BTL, LH)
        # key part: project every position once, lay key slots 0..L-2 of each
        # example side-by-side along lanes, broadcast over the L queries.
        Pk = jnp.dot(Ef, piece(w_ref, wo['w1b']),
                     preferred_element_type=jnp.float32) + piece(c_ref, co['b1'])
        Pk3 = Pk.reshape(BT, L, H)                              # leading split
        Bk = jnp.concatenate([Pk3[:, k:k + 1, :] for k in range(Lm1)],
                             axis=-1)                           # (BT, 1, LH)
        T = jnp.tanh(A_rep.reshape(BT, L, LH) + Bk)             # (BT, L, LH)

        # H-contraction against block-diagonal w2 -> per-slot scores
        f = jnp.dot(T.reshape(BTL, LH), piece(w_ref, wo['w2blk']),
                    preferred_element_type=jnp.float32).reshape(BT, L, Lm1)

        # distance decay (attlinear2 bias folded into dadd) + softmax
        dmul = piece(c_ref, co['dmul'])                         # (L, Lm1)
        dadd = piece(c_ref, co['dadd'])                         # (L, Lm1)
        S = dmul[None] * f + dadd[None]
        S = S - jnp.max(S, axis=-1, keepdims=True)
        P = jnp.exp(S)
        alpha = P / jnp.sum(P, axis=-1, keepdims=True)          # (BT, L, Lm1)

        # ---- attention output: 2*Lm1 broadcast-MACs on the VPU --------------
        # value_k = E[:, k + (k >= i)] = E[k] + [k>=i] * (E[k+1] - E[k])
        mt = piece(c_ref, co['mt'])                             # (L, Lm1) [k>=i]
        alpha_m = alpha * mt[None]
        att = jnp.zeros((BT, L, D), jnp.float32)
        for k in range(Lm1):
            e_k = E3[:, k:k + 1, :]                             # (BT, 1, D)
            d_k = E3[:, k + 1:k + 2, :] - e_k
            att = att + alpha[:, :, k:k + 1] * e_k + alpha_m[:, :, k:k + 1] * d_k

        # ---- concat + shared zero-padded im2col + ONE conv matmul -----------
        X = jnp.concatenate([E3, att], axis=2)                  # (BT, L, 2D)
        Xp = jnp.concatenate(
            [X, jnp.zeros((BT, max_fs - 1, D2), jnp.float32)], axis=1)
        Z = jnp.concatenate([Xp[:, t:t + L, :] for t in range(max_fs)],
                            axis=2).reshape(BTL, Kc)            # im2col
        R = jnp.dot(Z, piece(w_ref, wo['wc']),
                    preferred_element_type=jnp.float32).reshape(BT, L, C3)
        # bias + (-inf) validity mask handles the three different pool widths
        pooled = jnp.max(R + piece(c_ref, co['bm'])[None], axis=1)   # (BT, 3C)

        # ---- classifier + log-softmax on a 128-lane padded slab -------------
        # TODO(synk): nn.Dropout(0.5) is identity in eval mode; not applied.
        logits = jnp.dot(pooled, piece(w_ref, wo['wl']),
                         preferred_element_type=jnp.float32) \
                 + piece(c_ref, co['bl'])                       # pad lanes ~ -1e30
        z = logits - jnp.max(logits, axis=-1, keepdims=True)
        o_ref[...] = z - jnp.log(jnp.sum(jnp.exp(z), axis=-1, keepdims=True))

    return kernel


# ------------------------------ parameter init -------------------------------
def make_params(key):
    D, H, C, NC = EMBEDDIM, ATTHIDDEN, CHANNELS, NUMCLASSES
    ks = jax.random.split(key, 12)

    def u(k, shape, fan_in):
        bound = 1.0 / math.sqrt(fan_in)
        return jax.random.uniform(k, shape, jnp.float32, -bound, bound)

    return dict(
        embedmatrix=jax.random.normal(ks[0], (VOCAB, D), jnp.float32),
        att1_w=u(ks[1], (H, 2 * D), 2 * D),
        att1_b=u(ks[2], (H,), 2 * D),
        att2_w=u(ks[3], (1, H), H),
        att2_b=u(ks[4], (1,), H),
        c1_w=u(ks[5], (C, 2 * D, FILTERSIZES[0]), 2 * D * FILTERSIZES[0]),
        c1_b=u(ks[6], (C,), 2 * D * FILTERSIZES[0]),
        c2_w=u(ks[7], (C, 2 * D, FILTERSIZES[1]), 2 * D * FILTERSIZES[1]),
        c2_b=u(ks[8], (C,), 2 * D * FILTERSIZES[1]),
        c3_w=u(ks[9], (C, 2 * D, FILTERSIZES[2]), 2 * D * FILTERSIZES[2]),
        c3_b=u(ks[10], (C,), 2 * D * FILTERSIZES[2]),
        lin_w=u(ks[11], (NC, 3 * C), 3 * C),
        lin_b=jnp.zeros((NC,), jnp.float32),
    )


# ------------------------- one-time prep + forward ---------------------------
def build_abcnn(params):
    """One-time parameter preprocessing.  Returns forward(x_idx) -> log-probs.

    Everything that depends only on the parameters (tile/kron/conv stacking,
    decay tables, masks, slab packing) happens HERE, not per call.
    """
    D, H, L, C, NC = EMBEDDIM, ATTHIDDEN, MAXLEN, CHANNELS, NUMCLASSES
    Lm1, D2, C3 = L - 1, 2 * D, 3 * C
    max_fs = max(FILTERSIZES)
    Kc = max_fs * D2

    # ---------------- structured weight slab (matmul RHS operands) -----------
    W1 = params['att1_w']                                 # (H, 2D)
    W1a = W1[:, :D].T                                     # (D, H) query part
    W1b = W1[:, D:].T                                     # (D, H) key part
    W1a_rep = jnp.tile(W1a, (1, Lm1))                     # (D, Lm1*H)
    w2col = params['att2_w'].reshape(H, 1)
    W2blk = jnp.kron(jnp.eye(Lm1, dtype=jnp.float32), w2col)    # (Lm1*H, Lm1)

    Wc = jnp.zeros((Kc, C3), jnp.float32)                 # stacked conv weights
    conv_ws = (params['c1_w'], params['c2_w'], params['c3_w'])
    conv_bs = (params['c1_b'], params['c2_b'], params['c3_b'])
    for g, (w, fs) in enumerate(zip(conv_ws, FILTERSIZES)):
        taps = jnp.transpose(w, (2, 1, 0)).reshape(fs * D2, C)  # (fs*2D, C)
        Wc = Wc.at[:fs * D2, g * C:(g + 1) * C].set(taps)

    Wl_pad = jnp.zeros((C3, OUT_LANES), jnp.float32).at[:, :NC].set(
        params['lin_w'].T)
    Emb = params['embedmatrix'].astype(jnp.float32)       # (VOCAB, D)

    w_slab, w_off = _pack_slab([
        [('wc', Wc), ('emb', Emb), ('w1b', W1b), ('w2blk', W2blk)],
        [('w1a', W1a_rep)],
        [('wl', Wl_pad)],
    ])

    # ---------------- constant slab (biases / decay / masks) -----------------
    b1 = params['att1_b'].reshape(1, H)
    b2 = params['att2_b'].reshape(())
    ii = np.arange(L)[:, None]
    kk = np.arange(Lm1)[None, :]
    decay = ((1.0 - LAMDA) ** (np.abs(ii - kk) - 1)).astype(np.float32)
    dmul = jnp.asarray(decay)                             # (L, Lm1), NOT batch-tiled
    dadd = dmul * b2                                      # folds b2 in
    mt = jnp.asarray((kk >= ii).astype(np.float32))       # (L, Lm1)

    BM = jnp.full((L, C3), NEG, jnp.float32)              # conv bias + pool mask
    for g, (b, fs) in enumerate(zip(conv_bs, FILTERSIZES)):
        Tg = L - fs + 1
        BM = BM.at[:Tg, g * C:(g + 1) * C].set(
            jnp.broadcast_to(b[None, :], (Tg, C)))

    bl_pad = jnp.full((1, OUT_LANES), NEG, jnp.float32).at[0, :NC].set(
        params['lin_b'])

    c_slab, c_off = _pack_slab([
        [('b1', b1), ('dmul', dmul), ('dadd', dadd), ('mt', mt), ('bm', BM)],
        [('bl', bl_pad)],
    ])

    w_slab = jax.device_put(w_slab)
    c_slab = jax.device_put(c_slab)

    def _forward(x_idx, w_s, c_s):
        B, Lx = x_idx.shape
        assert Lx == L
        # Batch tiling: single tile for tiny batches; otherwise >= 2 "parallel"
        # grid steps (so both v7x TensorCores participate), tile up to 128
        # examples (up to 1024 matmul rows per step), multiple-of-8 rows.
        if B <= 8:
            bt = B
        else:
            bt = min(128, ((-(-B // 2) + 7) // 8) * 8)
        n_tiles = -(-B // bt)
        B_pad = n_tiles * bt

        x = x_idx.astype(jnp.int32)
        if B_pad != B:
            x = jnp.concatenate([x, jnp.zeros((B_pad - B, L), jnp.int32)], axis=0)
        x2 = x.reshape(B_pad * L, 1)       # (rows, 1): lane-broadcast-friendly

        kernel = _make_abcnn_kernel(bt, L, D, H, C3, VOCAB, max_fs, w_off, c_off)
        out = pl.pallas_call(
            kernel,
            out_shape=jax.ShapeDtypeStruct((B_pad, OUT_LANES), jnp.float32),
            grid=(n_tiles,),
            in_specs=[
                pl.BlockSpec((bt * L, 1), lambda i: (i, 0)),        # token ids
                pl.BlockSpec(w_s.shape, lambda i: (0, 0)),          # weight slab
                pl.BlockSpec(c_s.shape, lambda i: (0, 0)),          # const slab
            ],
            out_specs=pl.BlockSpec((bt, OUT_LANES), lambda i: (i, 0)),
            compiler_params=pltpu.CompilerParams(
                dimension_semantics=("parallel",),
                vmem_limit_bytes=32 * 1024 * 1024,   # explicit budget (v7x: 64 MiB phys)
            ),
        )(x2, w_s, c_s)
        return out[:B, :NUMCLASSES]

    fwd = jax.jit(_forward)
    return lambda x_idx: fwd(x_idx, w_slab, c_slab)


# --------------------- pure-JAX reference (mirrors torch) ---------------------
def abcnn_reference(x_idx, params):
    D, L = EMBEDDIM, MAXLEN
    with jax.default_matmul_precision("highest"):      # true f32 reference
        emb = params['embedmatrix'][x_idx]
        W1, b1 = params['att1_w'], params['att1_b']
        W2, b2 = params['att2_w'], params['att2_b']
        rows = []
        for i in range(L):
            cur = emb[:, i, :]
            scores, vals = [], []
            idx = 0
            for j in range(L):
                if j == i:
                    continue
                vals.append(emb[:, j, :])
                con = jnp.concatenate([cur, emb[:, idx, :]], axis=1)
                h = jnp.tanh(con @ W1.T + b1)
                s = h @ W2.T + b2
                s = ((1.0 - LAMDA) ** (abs(i - idx) - 1)) * s
                scores.append(s[:, 0])
                idx += 1
            S = jnp.stack(scores, axis=1)
            alpha = jax.nn.softmax(S, axis=1)
            V = jnp.stack(vals, axis=1)
            rows.append(jnp.sum(alpha[:, :, None] * V, axis=1))
        attout = jnp.stack(rows, axis=1)
        Xc = jnp.concatenate([emb, attout], axis=2)
        XT = jnp.transpose(Xc, (0, 2, 1))                 # (B, 2D, L) == torch NCL
        pooled = []
        for (w, b) in [(params['c1_w'], params['c1_b']),
                       (params['c2_w'], params['c2_b']),
                       (params['c3_w'], params['c3_b'])]:
            fs = w.shape[2]
            Tt = L - fs + 1
            cols = []
            for t in range(Tt):
                win = XT[:, :, t:t + fs]                  # (B, 2D, fs)
                cols.append(jnp.einsum('bcf,ocf->bo', win, w) + b)
            conv = jnp.stack(cols, axis=2)                # (B, C, Tt)
            pooled.append(jnp.max(conv, axis=2))
        pcat = jnp.concatenate(pooled, axis=1)
        logits = pcat @ params['lin_w'].T + params['lin_b']
        return jax.nn.log_softmax(logits, axis=1)


if __name__ == "__main__":
    key = jax.random.PRNGKey(0)
    pkey, xkey, xkey2 = jax.random.split(key, 3)
    params = make_params(pkey)

    forward = build_abcnn(params)      # one-time prep: slabs built & cached here

    # small demo batch (single-tile path)
    x = jax.random.randint(xkey, (BATCH, MAXLEN), 0, VOCAB, dtype=jnp.int32)
    out = jax.block_until_ready(forward(x))
    ref = abcnn_reference(x, params)
    assert out.shape == (BATCH, NUMCLASSES)
    assert bool(jnp.all(jnp.isfinite(out)))
    # tolerance bounded by TPU default matmul passes, not the kernel layout
    np.testing.assert_allclose(np.asarray(out), np.asarray(ref),
                               rtol=1e-2, atol=1e-2)

    # larger batch exercising the multi-tile "parallel" grid + batch padding
    xb = jax.random.randint(xkey2, (24, MAXLEN), 0, VOCAB, dtype=jnp.int32)
    outb = jax.block_until_ready(forward(xb))
    refb = abcnn_reference(xb, params)
    assert outb.shape == (24, NUMCLASSES)
    np.testing.assert_allclose(np.asarray(outb), np.asarray(refb),
                               rtol=1e-2, atol=1e-2)

    print("KERNEL_OK")
</pallas_src>

<mosaic_0001>
module attributes {stable_mosaic.version = 11 : i64} {
  func.func @kernel(%arg0: i32, %arg1: memref<16x1xi32, #tpu.memory_space<vmem>>, %arg2: memref<376x128xf32, #tpu.memory_space<vmem>>, %arg3: memref<16x128xf32, #tpu.memory_space<vmem>>, %arg4: memref<2x128xf32, #tpu.memory_space<vmem>>) attributes {dimension_semantics = [#tpu.dimension_semantics<parallel>], iteration_bounds = array<i64: 1>, scalar_prefetch = 0 : i64, scratch_operands = 0 : i64, tpu.core_type = #tpu.core_type<tc>, window_params = [{transform_indices = @transform_0, window_bounds = array<i64: 16, 1>}, {pipeline_mode = #tpu.pipeline_mode<synchronous>, transform_indices = @transform_1, window_bounds = array<i64: 376, 128>}, {pipeline_mode = #tpu.pipeline_mode<synchronous>, transform_indices = @transform_2, window_bounds = array<i64: 16, 128>}, {transform_indices = @transform_3, window_bounds = array<i64: 2, 128>}]} {
    %c0 = arith.constant 0 : index
    %c0_0 = arith.constant 0 : index
    %0 = vector.load %arg1[%c0, %c0_0] : memref<16x1xi32, #tpu.memory_space<vmem>>, vector<16x1xi32>
    %1 = tpu.iota {dimensions = array<i32: 1>} : vector<16x16xi32>
    %2 = vector.broadcast %0 : vector<16x1xi32> to vector<16x16xi32>
    %3 = arith.cmpi eq, %2, %1 : vector<16x16xi32>
    %4 = arith.extui %3 : vector<16x16xi1> to vector<16x16xi32>
    %5 = arith.sitofp %4 : vector<16x16xi32> to vector<16x16xf32>
    %c0_1 = arith.constant 0 : index
    %c24 = arith.constant 24 : index
    %6 = vector.load %arg2[%c0_1, %c24] : memref<376x128xf32, #tpu.memory_space<vmem>>, vector<16x32xf32>
    %cst = arith.constant dense<0.000000e+00> : vector<16x32xf32>
    %7 = tpu.matmul %5, %6, %cst {dimension_numbers = #tpu.dot_dimension_numbers<[1], [0], [0], [1], [0, 0, 1, 1], [], []>} : vector<16x16xf32>, vector<16x32xf32>, vector<16x32xf32> -> vector<16x32xf32>
    %8 = vector.shape_cast %7 : vector<16x32xf32> to vector<2x8x32xf32>
    %c320 = arith.constant 320 : index
    %c0_2 = arith.constant 0 : index
    %9 = vector.load %arg2[%c320, %c0_2] : memref<376x128xf32, #tpu.memory_space<vmem>>, vector<32x112xf32>
    %cst_3 = arith.constant dense<0.000000e+00> : vector<16x112xf32>
    %10 = tpu.matmul %7, %9, %cst_3 {dimension_numbers = #tpu.dot_dimension_numbers<[1], [0], [0], [1], [0, 0, 1, 1], [], []>} : vector<16x32xf32>, vector<32x112xf32>, vector<16x112xf32> -> vector<16x112xf32>
    %c0_4 = arith.constant 0 : index
    %c56 = arith.constant 56 : index
    %11 = vector.load %arg2[%c0_4, %c56] : memref<376x128xf32, #tpu.memory_space<vmem>>, vector<32x16xf32>
    %cst_5 = arith.constant dense<0.000000e+00> : vector<16x16xf32>
    %12 = tpu.matmul %7, %11, %cst_5 {dimension_numbers = #tpu.dot_dimension_numbers<[1], [0], [0], [1], [0, 0, 1, 1], [], []>} : vector<16x32xf32>, vector<32x16xf32>, vector<16x16xf32> -> vector<16x16xf32>
    %c0_6 = arith.constant 0 : index
    %c0_7 = arith.constant 0 : index
    %13 = vector.load %arg3[%c0_6, %c0_7] : memref<16x128xf32, #tpu.memory_space<vmem>>, vector<1x16xf32>
    %14 = vector.broadcast %13 : vector<1x16xf32> to vector<16x16xf32>
    %15 = arith.addf %12, %14 : vector<16x16xf32>
    %16 = vector.shape_cast %15 : vector<16x16xf32> to vector<2x8x16xf32>
    %17 = vector.extract_strided_slice %16 {offsets = [0, 0, 0], sizes = [2, 1, 16], strides = [1, 1, 1]} : vector<2x8x16xf32> to vector<2x1x16xf32>
    %18 = vector.extract_strided_slice %16 {offsets = [0, 1, 0], sizes = [2, 1, 16], strides = [1, 1, 1]} : vector<2x8x16xf32> to vector<2x1x16xf32>
    %19 = vector.extract_strided_slice %16 {offsets = [0, 2, 0], sizes = [2, 1, 16], strides = [1, 1, 1]} : vector<2x8x16xf32> to vector<2x1x16xf32>
    %20 = vector.extract_strided_slice %16 {offsets = [0, 3, 0], sizes = [2, 1, 16], strides = [1, 1, 1]} : vector<2x8x16xf32> to vector<2x1x16xf32>
    %21 = vector.extract_strided_slice %16 {offsets = [0, 4, 0], sizes = [2, 1, 16], strides = [1, 1, 1]} : vector<2x8x16xf32> to vector<2x1x16xf32>
    %22 = vector.extract_strided_slice %16 {offsets = [0, 5, 0], sizes = [2, 1, 16], strides = [1, 1, 1]} : vector<2x8x16xf32> to vector<2x1x16xf32>
    %23 = vector.extract_strided_slice %16 {offsets = [0, 6, 0], sizes = [2, 1, 16], strides = [1, 1, 1]} : vector<2x8x16xf32> to vector<2x1x16xf32>
    %24 = tpu.concatenate %17, %18, %19, %20, %21, %22, %23 in 2 : vector<2x1x16xf32>, vector<2x1x16xf32>, vector<2x1x16xf32>, vector<2x1x16xf32>, vector<2x1x16xf32>, vector<2x1x16xf32>, vector<2x1x16xf32> -> vector<2x1x112xf32>
    %25 = vector.shape_cast %10 : vector<16x112xf32> to vector<2x8x112xf32>
    %26 = vector.broadcast %24 : vector<2x1x112xf32> to vector<2x8x112xf32>
    %27 = arith.addf %25, %26 : vector<2x8x112xf32>
    %28 = math.tanh %27 : vector<2x8x112xf32>
    %29 = vector.shape_cast %28 : vector<2x8x112xf32> to vector<16x112xf32>
    %c0_8 = arith.constant 0 : index
    %c72 = arith.constant 72 : index
    %30 = vector.load %arg2[%c0_8, %c72] : memref<376x128xf32, #tpu.memory_space<vmem>>, vector<112x7xf32>
    %cst_9 = arith.constant dense<0.000000e+00> : vector<16x7xf32>
    %31 = tpu.matmul %29, %30, %cst_9 {dimension_numbers = #tpu.dot_dimension_numbers<[1], [0], [0], [1], [0, 0, 1, 1], [], []>} : vector<16x112xf32>, vector<112x7xf32>, vector<16x7xf32> -> vector<16x7xf32>
    %32 = vector.shape_cast %31 : vector<16x7xf32> to vector<2x8x7xf32>
    %c0_10 = arith.constant 0 : index
    %c16 = arith.constant 16 : index
    %33 = vector.load %arg3[%c0_10, %c16] : memref<16x128xf32, #tpu.memory_space<vmem>>, vector<8x7xf32>
    %c0_11 = arith.constant 0 : index
    %c23 = arith.constant 23 : index
    %34 = vector.load %arg3[%c0_11, %c23] : memref<16x128xf32, #tpu.memory_space<vmem>>, vector<8x7xf32>
    %35 = vector.shape_cast %33 : vector<8x7xf32> to vector<1x8x7xf32>
    %36 = vector.broadcast %35 : vector<1x8x7xf32> to vector<2x8x7xf32>
    %37 = arith.mulf %36, %32 : vector<2x8x7xf32>
    %38 = vector.shape_cast %34 : vector<8x7xf32> to vector<1x8x7xf32>
    %39 = vector.broadcast %38 : vector<1x8x7xf32> to vector<2x8x7xf32>
    %40 = arith.addf %37, %39 : vector<2x8x7xf32>
    %cst_12 = arith.constant dense<0xFF800000> : vector<2x8xf32>
    %41 = vector.multi_reduction <maximumf>, %40, %cst_12 [2] : vector<2x8x7xf32> to vector<2x8xf32>
    %42 = vector.shape_cast %41 : vector<2x8xf32> to vector<2x8x1xf32>
    %43 = vector.broadcast %42 : vector<2x8x1xf32> to vector<2x8x7xf32>
    %44 = arith.subf %40, %43 : vector<2x8x7xf32>
    %45 = math.exp %44 : vector<2x8x7xf32>
    %cst_13 = arith.constant dense<0.000000e+00> : vector<2x8xf32>
    %46 = vector.multi_reduction <add>, %45, %cst_13 [2] : vector<2x8x7xf32> to vector<2x8xf32>
    %47 = vector.shape_cast %46 : vector<2x8xf32> to vector<2x8x1xf32>
    %48 = vector.broadcast %47 : vector<2x8x1xf32> to vector<2x8x7xf32>
    %49 = arith.divf %45, %48 : vector<2x8x7xf32>
    %c0_14 = arith.constant 0 : index
    %c30 = arith.constant 30 : index
    %50 = vector.load %arg3[%c0_14, %c30] : memref<16x128xf32, #tpu.memory_space<vmem>>, vector<8x7xf32>
    %51 = vector.shape_cast %50 : vector<8x7xf32> to vector<1x8x7xf32>
    %52 = vector.broadcast %51 : vector<1x8x7xf32> to vector<2x8x7xf32>
    %53 = arith.mulf %49, %52 : vector<2x8x7xf32>
    %cst_15 = arith.constant 0.000000e+00 : f32
    %54 = vector.broadcast %cst_15 : f32 to vector<2x8x32xf32>
    %55 = vector.extract_strided_slice %8 {offsets = [0, 0, 0], sizes = [2, 1, 32], strides = [1, 1, 1]} : vector<2x8x32xf32> to vector<2x1x32xf32>
    %56 = vector.extract_strided_slice %8 {offsets = [0, 1, 0], sizes = [2, 1, 32], strides = [1, 1, 1]} : vector<2x8x32xf32> to vector<2x1x32xf32>
    %57 = arith.subf %56, %55 : vector<2x1x32xf32>
    %58 = vector.extract_strided_slice %49 {offsets = [0, 0, 0], sizes = [2, 8, 1], strides = [1, 1, 1]} : vector<2x8x7xf32> to vector<2x8x1xf32>
    %59 = vector.broadcast %58 : vector<2x8x1xf32> to vector<2x8x32xf32>
    %60 = vector.broadcast %55 : vector<2x1x32xf32> to vector<2x8x32xf32>
    %61 = arith.mulf %59, %60 : vector<2x8x32xf32>
    %62 = arith.addf %54, %61 : vector<2x8x32xf32>
    %63 = vector.extract_strided_slice %53 {offsets = [0, 0, 0], sizes = [2, 8, 1], strides = [1, 1, 1]} : vector<2x8x7xf32> to vector<2x8x1xf32>
    %64 = vector.broadcast %63 : vector<2x8x1xf32> to vector<2x8x32xf32>
    %65 = vector.broadcast %57 : vector<2x1x32xf32> to vector<2x8x32xf32>
    %66 = arith.mulf %64, %65 : vector<2x8x32xf32>
    %67 = arith.addf %62, %66 : vector<2x8x32xf32>
    %68 = vector.extract_strided_slice %8 {offsets = [0, 1, 0], sizes = [2, 1, 32], strides = [1, 1, 1]} : vector<2x8x32xf32> to vector<2x1x32xf32>
    %69 = vector.extract_strided_slice %8 {offsets = [0, 2, 0], sizes = [2, 1, 32], strides = [1, 1, 1]} : vector<2x8x32xf32> to vector<2x1x32xf32>
    %70 = arith.subf %69, %68 : vector<2x1x32xf32>
    %71 = vector.extract_strided_slice %49 {offsets = [0, 0, 1], sizes = [2, 8, 1], strides = [1, 1, 1]} : vector<2x8x7xf32> to vector<2x8x1xf32>
    %72 = vector.broadcast %71 : vector<2x8x1xf32> to vector<2x8x32xf32>
    %73 = vector.broadcast %68 : vector<2x1x32xf32> to vector<2x8x32xf32>
    %74 = arith.mulf %72, %73 : vector<2x8x32xf32>
    %75 = arith.addf %67, %74 : vector<2x8x32xf32>
    %76 = vector.extract_strided_slice %53 {offsets = [0, 0, 1], sizes = [2, 8, 1], strides = [1, 1, 1]} : vector<2x8x7xf32> to vector<2x8x1xf32>
    %77 = vector.broadcast %76 : vector<2x8x1xf32> to vector<2x8x32xf32>
    %78 = vector.broadcast %70 : vector<2x1x32xf32> to vector<2x8x32xf32>
    %79 = arith.mulf %77, %78 : vector<2x8x32xf32>
    %80 = arith.addf %75, %79 : vector<2x8x32xf32>
    %81 = vector.extract_strided_slice %8 {offsets = [0, 2, 0], sizes = [2, 1, 32], strides = [1, 1, 1]} : vector<2x8x32xf32> to vector<2x1x32xf32>
    %82 = vector.extract_strided_slice %8 {offsets = [0, 3, 0], sizes = [2, 1, 32], strides = [1, 1, 1]} : vector<2x8x32xf32> to vector<2x1x32xf32>
    %83 = arith.subf %82, %81 : vector<2x1x32xf32>
    %84 = vector.extract_strided_slice %49 {offsets = [0, 0, 2], sizes = [2, 8, 1], strides = [1, 1, 1]} : vector<2x8x7xf32> to vector<2x8x1xf32>
    %85 = vector.broadcast %84 : vector<2x8x1xf32> to vector<2x8x32xf32>
    %86 = vector.broadcast %81 : vector<2x1x32xf32> to vector<2x8x32xf32>
    %87 = arith.mulf %85, %86 : vector<2x8x32xf32>
    %88 = arith.addf %80, %87 : vector<2x8x32xf32>
    %89 = vector.extract_strided_slice %53 {offsets = [0, 0, 2], sizes = [2, 8, 1], strides = [1, 1, 1]} : vector<2x8x7xf32> to vector<2x8x1xf32>
    %90 = vector.broadcast %89 : vector<2x8x1xf32> to vector<2x8x32xf32>
    %91 = vector.broadcast %83 : vector<2x1x32xf32> to vector<2x8x32xf32>
    %92 = arith.mulf %90, %91 : vector<2x8x32xf32>
    %93 = arith.addf %88, %92 : vector<2x8x32xf32>
    %94 = vector.extract_strided_slice %8 {offsets = [0, 3, 0], sizes = [2, 1, 32], strides = [1, 1, 1]} : vector<2x8x32xf32> to vector<2x1x32xf32>
    %95 = vector.extract_strided_slice %8 {offsets = [0, 4, 0], sizes = [2, 1, 32], strides = [1, 1, 1]} : vector<2x8x32xf32> to vector<2x1x32xf32>
    %96 = arith.subf %95, %94 : vector<2x1x32xf32>
    %97 = vector.extract_strided_slice %49 {offsets = [0, 0, 3], sizes = [2, 8, 1], strides = [1, 1, 1]} : vector<2x8x7xf32> to vector<2x8x1xf32>
    %98 = vector.broadcast %97 : vector<2x8x1xf32> to vector<2x8x32xf32>
    %99 = vector.broadcast %94 : vector<2x1x32xf32> to vector<2x8x32xf32>
    %100 = arith.mulf %98, %99 : vector<2x8x32xf32>
    %101 = arith.addf %93, %100 : vector<2x8x32xf32>
    %102 = vector.extract_strided_slice %53 {offsets = [0, 0, 3], sizes = [2, 8, 1], strides = [1, 1, 1]} : vector<2x8x7xf32> to vector<2x8x1xf32>
    %103 = vector.broadcast %102 : vector<2x8x1xf32> to vector<2x8x32xf32>
    %104 = vector.broadcast %96 : vector<2x1x32xf32> to vector<2x8x32xf32>
    %105 = arith.mulf %103, %104 : vector<2x8x32xf32>
    %106 = arith.addf %101, %105 : vector<2x8x32xf32>
    %107 = vector.extract_strided_slice %8 {offsets = [0, 4, 0], sizes = [2, 1, 32], strides = [1, 1, 1]} : vector<2x8x32xf32> to vector<2x1x32xf32>
    %108 = vector.extract_strided_slice %8 {offsets = [0, 5, 0], sizes = [2, 1, 32], strides = [1, 1, 1]} : vector<2x8x32xf32> to vector<2x1x32xf32>
    %109 = arith.subf %108, %107 : vector<2x1x32xf32>
    %110 = vector.extract_strided_slice %49 {offsets = [0, 0, 4], sizes = [2, 8, 1], strides = [1, 1, 1]} : vector<2x8x7xf32> to vector<2x8x1xf32>
    %111 = vector.broadcast %110 : vector<2x8x1xf32> to vector<2x8x32xf32>
    %112 = vector.broadcast %107 : vector<2x1x32xf32> to vector<2x8x32xf32>
    %113 = arith.mulf %111, %112 : vector<2x8x32xf32>
    %114 = arith.addf %106, %113 : vector<2x8x32xf32>
    %115 = vector.extract_strided_slice %53 {offsets = [0, 0, 4], sizes = [2, 8, 1], strides = [1, 1, 1]} : vector<2x8x7xf32> to vector<2x8x1xf32>
    %116 = vector.broadcast %115 : vector<2x8x1xf32> to vector<2x8x32xf32>
    %117 = vector.broadcast %109 : vector<2x1x32xf32> to vector<2x8x32xf32>
    %118 = arith.mulf %116, %117 : vector<2x8x32xf32>
    %119 = arith.addf %114, %118 : vector<2x8x32xf32>
    %120 = vector.extract_strided_slice %8 {offsets = [0, 5, 0], sizes = [2, 1, 32], strides = [1, 1, 1]} : vector<2x8x32xf32> to vector<2x1x32xf32>
    %121 = vector.extract_strided_slice %8 {offsets = [0, 6, 0], sizes = [2, 1, 32], strides = [1, 1, 1]} : vector<2x8x32xf32> to vector<2x1x32xf32>
    %122 = arith.subf %121, %120 : vector<2x1x32xf32>
    %123 = vector.extract_strided_slice %49 {offsets = [0, 0, 5], sizes = [2, 8, 1], strides = [1, 1, 1]} : vector<2x8x7xf32> to vector<2x8x1xf32>
    %124 = vector.broadcast %123 : vector<2x8x1xf32> to vector<2x8x32xf32>
    %125 = vector.broadcast %120 : vector<2x1x32xf32> to vector<2x8x32xf32>
    %126 = arith.mulf %124, %125 : vector<2x8x32xf32>
    %127 = arith.addf %119, %126 : vector<2x8x32xf32>
    %128 = vector.extract_strided_slice %53 {offsets = [0, 0, 5], sizes = [2, 8, 1], strides = [1, 1, 1]} : vector<2x8x7xf32> to vector<2x8x1xf32>
    %129 = vector.broadcast %128 : vector<2x8x1xf32> to vector<2x8x32xf32>
    %130 = vector.broadcast %122 : vector<2x1x32xf32> to vector<2x8x32xf32>
    %131 = arith.mulf %129, %130 : vector<2x8x32xf32>
    %132 = arith.addf %127, %131 : vector<2x8x32xf32>
    %133 = vector.extract_strided_slice %8 {offsets = [0, 6, 0], sizes = [2, 1, 32], strides = [1, 1, 1]} : vector<2x8x32xf32> to vector<2x1x32xf32>
    %134 = vector.extract_strided_slice %8 {offsets = [0, 7, 0], sizes = [2, 1, 32], strides = [1, 1, 1]} : vector<2x8x32xf32> to vector<2x1x32xf32>
    %135 = arith.subf %134, %133 : vector<2x1x32xf32>
    %136 = vector.extract_strided_slice %49 {offsets = [0, 0, 6], sizes = [2, 8, 1], strides = [1, 1, 1]} : vector<2x8x7xf32> to vector<2x8x1xf32>
    %137 = vector.broadcast %136 : vector<2x8x1xf32> to vector<2x8x32xf32>
    %138 = vector.broadcast %133 : vector<2x1x32xf32> to vector<2x8x32xf32>
    %139 = arith.mulf %137, %138 : vector<2x8x32xf32>
    %140 = arith.addf %132, %139 : vector<2x8x32xf32>
    %141 = vector.extract_strided_slice %53 {offsets = [0, 0, 6], sizes = [2, 8, 1], strides = [1, 1, 1]} : vector<2x8x7xf32> to vector<2x8x1xf32>
    %142 = vector.broadcast %141 : vector<2x8x1xf32> to vector<2x8x32xf32>
    %143 = vector.broadcast %135 : vector<2x1x32xf32> to vector<2x8x32xf32>
    %144 = arith.mulf %142, %143 : vector<2x8x32xf32>
    %145 = arith.addf %140, %144 : vector<2x8x32xf32>
    %146 = tpu.concatenate %8, %145 in 2 : vector<2x8x32xf32>, vector<2x8x32xf32> -> vector<2x8x64xf32>
    %cst_16 = arith.constant 0.000000e+00 : f32
    %147 = vector.broadcast %cst_16 : f32 to vector<2x4x64xf32>
    %148 = tpu.concatenate %146, %147 in 1 : vector<2x8x64xf32>, vector<2x4x64xf32> -> vector<2x12x64xf32>
    %149 = vector.extract_strided_slice %148 {offsets = [0, 0, 0], sizes = [2, 8, 64], strides = [1, 1, 1]} : vector<2x12x64xf32> to vector<2x8x64xf32>
    %150 = vector.extract_strided_slice %148 {offsets = [0, 1, 0], sizes = [2, 8, 64], strides = [1, 1, 1]} : vector<2x12x64xf32> to vector<2x8x64xf32>
    %151 = vector.extract_strided_slice %148 {offsets = [0, 2, 0], sizes = [2, 8, 64], strides = [1, 1, 1]} : vector<2x12x64xf32> to vector<2x8x64xf32>
    %152 = vector.extract_strided_slice %148 {offsets = [0, 3, 0], sizes = [2, 8, 64], strides = [1, 1, 1]} : vector<2x12x64xf32> to vector<2x8x64xf32>
    %153 = vector.extract_strided_slice %148 {offsets = [0, 4, 0], sizes = [2, 8, 64], strides = [1, 1, 1]} : vector<2x12x64xf32> to vector<2x8x64xf32>
    %154 = tpu.concatenate %149, %150, %151, %152, %153 in 2 : vector<2x8x64xf32>, vector<2x8x64xf32>, vector<2x8x64xf32>, vector<2x8x64xf32>, vector<2x8x64xf32> -> vector<2x8x320xf32>
    %155 = vector.shape_cast %154 : vector<2x8x320xf32> to vector<16x320xf32>
    %c0_17 = arith.constant 0 : index
    %c0_18 = arith.constant 0 : index
    %156 = vector.load %arg2[%c0_17, %c0_18] : memref<376x128xf32, #tpu.memory_space<vmem>>, vector<320x24xf32>
    %cst_19 = arith.constant dense<0.000000e+00> : vector<16x24xf32>
    %157 = tpu.matmul %155, %156, %cst_19 {dimension_numbers = #tpu.dot_dimension_numbers<[1], [0], [0], [1], [0, 0, 1, 1], [], []>} : vector<16x320xf32>, vector<320x24xf32>, vector<16x24xf32> -> vector<16x24xf32>
    %158 = vector.shape_cast %157 : vector<16x24xf32> to vector<2x8x24xf32>
    %c0_20 = arith.constant 0 : index
    %c37 = arith.constant 37 : index
    %159 = vector.load %arg3[%c0_20, %c37] : memref<16x128xf32, #tpu.memory_space<vmem>>, vector<8x24xf32>
    %160 = vector.shape_cast %159 : vector<8x24xf32> to vector<1x8x24xf32>
    %161 = vector.broadcast %160 : vector<1x8x24xf32> to vector<2x8x24xf32>
    %162 = arith.addf %158, %161 : vector<2x8x24xf32>
    %cst_21 = arith.constant dense<0xFF800000> : vector<2x24xf32>
    %163 = vector.multi_reduction <maximumf>, %162, %cst_21 [1] : vector<2x8x24xf32> to vector<2x24xf32>
    %c352 = arith.constant 352 : index
    %c0_22 = arith.constant 0 : index
    %164 = vector.load %arg2[%c352, %c0_22] : memref<376x128xf32, #tpu.memory_space<vmem>>, vector<24x128xf32>
    %cst_23 = arith.constant dense<0.000000e+00> : vector<2x128xf32>
    %165 = tpu.matmul %163, %164, %cst_23 {dimension_numbers = #tpu.dot_dimension_numbers<[1], [0], [0], [1], [0, 0, 1, 1], [], []>} : vector<2x24xf32>, vector<24x128xf32>, vector<2x128xf32> -> vector<2x128xf32>
    %c8 = arith.constant 8 : index
    %c0_24 = arith.constant 0 : index
    %166 = vector.load %arg3[%c8, %c0_24] : memref<16x128xf32, #tpu.memory_space<vmem>>, vector<1x128xf32>
    %167 = vector.broadcast %166 : vector<1x128xf32> to vector<2x128xf32>
    %168 = arith.addf %165, %167 : vector<2x128xf32>
    %cst_25 = arith.constant dense<0xFF800000> : vector<2xf32>
    %169 = vector.multi_reduction <maximumf>, %168, %cst_25 [1] : vector<2x128xf32> to vector<2xf32>
    %170 = vector.shape_cast %169 : vector<2xf32> to vector<2x1xf32>
    %171 = vector.broadcast %170 : vector<2x1xf32> to vector<2x128xf32>
    %172 = arith.subf %168, %171 : vector<2x128xf32>
    %173 = math.exp %172 : vector<2x128xf32>
    %cst_26 = arith.constant dense<0.000000e+00> : vector<2xf32>
    %174 = vector.multi_reduction <add>, %173, %cst_26 [1] : vector<2x128xf32> to vector<2xf32>
    %175 = vector.shape_cast %174 : vector<2xf32> to vector<2x1xf32>
    %176 = math.log %175 : vector<2x1xf32>
    %177 = vector.broadcast %176 : vector<2x1xf32> to vector<2x128xf32>
    %178 = arith.subf %172, %177 : vector<2x128xf32>
    %c0_27 = arith.constant 0 : index
    %c0_28 = arith.constant 0 : index
    %179 = vector.load %arg4[%c0_27, %c0_28] : memref<2x128xf32, #tpu.memory_space<vmem>>, vector<2x128xf32>
    tpu.vector_store %arg4[%c0_27, %c0_28], %178 {strides = array<i32>} : memref<2x128xf32, #tpu.memory_space<vmem>>, vector<2x128xf32>,
    return
  }
  func.func @transform_0(%arg0: i32) -> (i32, i32) {
    %c0_i32 = arith.constant 0 : i32
    %c0_i32_0 = arith.constant 0 : i32
    return %arg0, %c0_i32 : i32, i32
  }
  func.func @transform_1(%arg0: i32) -> (i32, i32) {
    %c0_i32 = arith.constant 0 : i32
    %c0_i32_0 = arith.constant 0 : i32
    %c0_i32_1 = arith.constant 0 : i32
    return %c0_i32, %c0_i32_0 : i32, i32
  }
  func.func @transform_2(%arg0: i32) -> (i32, i32) {
    %c0_i32 = arith.constant 0 : i32
    %c0_i32_0 = arith.constant 0 : i32
    %c0_i32_1 = arith.constant 0 : i32
    return %c0_i32, %c0_i32_0 : i32, i32
  }
  func.func @transform_3(%arg0: i32) -> (i32, i32) {
    %c0_i32 = arith.constant 0 : i32
    %c0_i32_0 = arith.constant 0 : i32
    return %arg0, %c0_i32 : i32, i32
  }
}

</mosaic_0001>

<llo_original>
// kernel: _forward.1
$region0: #{_forward.1}
  #allocation0 [shape = 'u32[]', space=smem, size = 0x4, offset = 0x4, fixed_abs, tag = 'smem constant byte address 0x4 - core index']
  #allocation1 [shape = 'u32[144,128]{1,0:T(1,128)}', space=vmem, size = 0x12000, scoped, tag = 'internal scratch']
  %s0 = inlined_call_operand.vmem [shape: s32[16,1], index: 0, kind: input, shape index: {}]
  %s1 = inlined_call_operand.hbm [shape: f32[376,128], index: 1, kind: input, shape index: {}]
  %s2 = inlined_call_operand.vmem [shape: f32[16,128], index: 2, kind: input, shape index: {}]
  %s3 = inlined_call_operand.hbm [shape: f32[2,128], index: 3, kind: output, shape index: {}]
  %s4 = sld [smem:[#allocation0]]
  $region26: #{_forward.1} parent=0
    _
  %s6 = ssub.s32 1, %s4
  %s7 = scalar_select 0, %s6, %s4
  $region1: #{_forward.1} parent=0
    #allocation2 [shape = 'u8[192512]{0}', space=vmem, size = 0x2f000, scoped, tag = 'input window, operand 1, single buffered']
    #allocation3 [shape = 's32[1]{0}', space=sflag, size = 0x4, scoped, tag = 'scoped memory for _forward.1']
    #allocation4 [shape = 's32[1]{0}', space=sflag, size = 0x4, scoped, tag = 'scoped memory for _forward.1']
    #allocation5 [shape = 'u8[1024]{0}', space=vmem, size = 0x400, scoped, tag = 'output window, operand 0, single buffered']
    %8 = vsyncpa [#allocation3], 0
    %9 = vsyncpa [#allocation4], 0
    // Predicated region
    $region2: #{_forward.1} parent=1 // pred_check
      _
    $region3: #{_forward.1} parent=1 // pred_check_branch
      %11 = sbr.rel (0) target = $region5
    $region4: #{_forward.1} parent=1 // pred_region
      _
    $region5: #{_forward.1} parent=1 // pred_fallthru
      _
    // Predicated region
    $region6: #{_forward.1} parent=1 // pred_check
      _
    $region7: #{_forward.1} parent=1 // pred_check_branch
      %13 = sbr.rel (0) target = $region9
    $region8: #{_forward.1} parent=1 // pred_region
      %s15 = ssub.s32 6016, 6016
      %16 = vsyncadd [#allocation3], %s15
      %s17 = sshll.u32 [#allocation2], 4
      %s18 = int_to_ptr.vmem [resolvable:$true] %s17
      %23 = dma.hbm_to_vmem [thread:$0]  %s1, 6016, %s18, [#allocation3], 128, 128, 8
    $region9: #{_forward.1} parent=1 // pred_fallthru
      _
    // Predicated region
    $region10: #{_forward.1} parent=1 // pred_check
      _
    $region11: #{_forward.1} parent=1 // pred_check_branch
      %25 = sbr.rel (0) target = $region13
    $region12: #{_forward.1} parent=1 // pred_region
      _
    $region13: #{_forward.1} parent=1 // pred_fallthru
      _
    // Predicated region
    $region14: #{_forward.1} parent=1 // pred_check
      _
    $region15: #{_forward.1} parent=1 // pred_check_branch
      %27 = sbr.rel (0) target = $region17
    $region16: #{_forward.1} parent=1 // pred_region
      %28 = dma.done [#allocation3], 6016
    $region17: #{_forward.1} parent=1 // pred_fallthru
      _
    %v29 = vld [vmem:[%s0] sm:$0xff]
    %v30 = vld [vmem:[%s0 + $0x8] sm:$0xff]
    %v31 = vlaneseq
    %v32 = vand.u32 %v31, 127
    %33 = vset.pattern.permute.xlu0 0
    %34 = vperm.xlu0 %33, %v29
    %v35 = vpop.permute.xlu0 %34
    %36 = vset.pattern.permute.xlu0 0
    %37 = vperm.xlu0 %36, %v30
    %v38 = vpop.permute.xlu0 %37
    %vm39 = vcmp.eq.s32.totalorder %v35, %v32
    %vm40 = vcmp.eq.s32.totalorder %v38, %v32
    %v41 = vsel %vm39, 1, 0
    %v42 = vsel %vm40, 1, 0
    %v43 = vcvt.s32.f32 %v41
    %v44 = vcvt.s32.f32 %v42
    %v45 = vld [vmem:[#allocation2] sm:$0xff]
    %v46 = vld [vmem:[#allocation2 + $0x8] sm:$0xff]
    %49 = vrot.lane.b32.xlu0 %v45, 104
    %v50 = vpop.permute.xlu0 %49
    %51 = vrot.lane.b32.xlu0 %v46, 104
    %v52 = vpop.permute.xlu0 %51
    %vm55 = vcmask 130048
    %v57 = vsel %vm55, %v43, 0
    %v60 = vsel %vm55, %v44, 0
    %62 = vmatprep.subr.mxu0 0.0
    %63 = vmatpush1.msra.mxu0 %v50
    %64 = vmatprep.subr.mxu0 0.0
    %65 = vmatpush1.msra.mxu0 %v52
    %66 = vmatprep.subr.mxu0 0.0
    %67 = vmatpush1.msra.mxu0 0.0
    %68 = vmatprep.subr.mxu0 0.0
    %69 = vmatpush1.msra.mxu0 0.0
    %70 = vmatprep.subr.mxu0 0.0
    %71 = vmatpush1.msra.mxu0 0.0
    %72 = vmatprep.subr.mxu0 0.0
    %73 = vmatpush1.msra.mxu0 0.0
    %74 = vmatprep.subr.mxu0 0.0
    %75 = vmatpush1.msra.mxu0 0.0
    %76 = vmatprep.subr.mxu0 0.0
    %77 = vmatpush1.msra.mxu0 0.0
    %78 = vmatprep.subr.mxu0 0.0
    %79 = vmatpush1.msra.mxu0 0.0
    %80 = vmatprep.subr.mxu0 0.0
    %81 = vmatpush1.msra.mxu0 0.0
    %82 = vmatprep.subr.mxu0 0.0
    %83 = vmatpush1.msra.mxu0 0.0
    %84 = vmatprep.subr.mxu0 0.0
    %85 = vmatpush1.msra.mxu0 0.0
    %86 = vmatprep.subr.mxu0 0.0
    %87 = vmatpush1.msra.mxu0 0.0
    %88 = vmatprep.subr.mxu0 0.0
    %89 = vmatpush1.msra.mxu0 0.0
    %90 = vmatprep.subr.mxu0 0.0
    %91 = vmatpush1.msra.mxu0 0.0
    %92 = vmatprep.subr.mxu0 0.0
    %93 = vmatpush1.msra.mxu0 0.0
    %94 = vmatprep.subr.mxu0 0.0
    %95 = vmatpush1.msra.mxu0 0.0
    %96 = vmatprep.subr.mxu0 0.0
    %97 = vmatpush1.msra.mxu0 0.0
    %98 = vmatprep.subr.mxu0 0.0
    %99 = vmatpush1.msra.mxu0 0.0
    %100 = vmatprep.subr.mxu0 0.0
    %101 = vmatpush1.msra.mxu0 0.0
    %102 = vmatprep.subr.mxu0 0.0
    %103 = vmatpush1.msra.mxu0 0.0
    %104 = vmatprep.subr.mxu0 0.0
    %105 = vmatpush1.msra.mxu0 0.0
    %106 = vmatprep.subr.mxu0 0.0
    %107 = vmatpush1.msra.mxu0 0.0
    %108 = vmatprep.subr.mxu0 0.0
    %109 = vmatpush1.msra.mxu0 0.0
    %110 = vmatprep.subr.mxu0 0.0
    %111 = vmatpush1.msra.mxu0 0.0
    %112 = vmatprep.subr.mxu0 0.0
    %113 = vmatpush1.msra.mxu0 0.0
    %114 = vmatprep.subr.mxu0 0.0
    %115 = vmatpush1.msra.mxu0 0.0
    %116 = vmatprep.subr.mxu0 0.0
    %117 = vmatpush1.msra.mxu0 0.0
    %118 = vmatprep.subr.mxu0 0.0
    %119 = vmatpush1.msra.mxu0 0.0
    %120 = vmatprep.subr.mxu0 0.0
    %121 = vmatpush1.msra.mxu0 0.0
    %122 = vmatprep.subr.mxu0 0.0
    %123 = vmatpush1.msra.mxu0 0.0
    %124 = vmatprep.subr.mxu0 0.0
    %125 = vmatpush1.msra.mxu0 0.0
    %126 = vmatprep.mubr.f32.mxu0 0.0
    %127 = vmatmul.mubr.f32.gmra.mrb[0].mxu0 %v57
    %v128 = vpop.f32.mrb[0].mxu0
    %v129 = vadd.f32 0.0, %v128
    %v130 = vpop.f32.mrb[0].mxu0
    %131 = vmatprep.mubr.f32.mxu0 0.0
    %132 = vmatmul.mubr.f32.gmra.mrb[0].mxu0 %v60
    %v133 = vpop.f32.mrb[0].mxu0
    %v134 = vadd.f32 0.0, %v133
    %v135 = vpop.f32.mrb[0].mxu0
    %136 = vdwg.mxu0
    %v137 = vld [vmem:[#allocation2 + $0x140] sm:$0xff]
    %v138 = vld [vmem:[#allocation2 + $0x148] sm:$0xff]
    %v139 = vld [vmem:[#allocation2 + $0x150] sm:$0xff]
    %v140 = vld [vmem:[#allocation2 + $0x158] sm:$0xff]
    %vm141 = vcmask 261120
    %v143 = vsel %vm141, %v129, 0
    %v146 = vsel %vm141, %v134, 0
    %148 = vmatprep.subr.mxu0 0.0
    %149 = vmatpush1.msra.mxu0 %v137
    %150 = vmatprep.subr.mxu0 0.0
    %151 = vmatpush1.msra.mxu0 %v138
    %152 = vmatprep.subr.mxu0 0.0
    %153 = vmatpush1.msra.mxu0 %v139
    %154 = vmatprep.subr.mxu0 0.0
    %155 = vmatpush1.msra.mxu0 %v140
    %156 = vmatprep.subr.mxu0 0.0
    %157 = vmatpush1.msra.mxu0 0.0
    %158 = vmatprep.subr.mxu0 0.0
    %159 = vmatpush1.msra.mxu0 0.0
    %160 = vmatprep.subr.mxu0 0.0
    %161 = vmatpush1.msra.mxu0 0.0
    %162 = vmatprep.subr.mxu0 0.0
    %163 = vmatpush1.msra.mxu0 0.0
    %164 = vmatprep.subr.mxu0 0.0
    %165 = vmatpush1.msra.mxu0 0.0
    %166 = vmatprep.subr.mxu0 0.0
    %167 = vmatpush1.msra.mxu0 0.0
    %168 = vmatprep.subr.mxu0 0.0
    %169 = vmatpush1.msra.mxu0 0.0
    %170 = vmatprep.subr.mxu0 0.0
    %171 = vmatpush1.msra.mxu0 0.0
    %172 = vmatprep.subr.mxu0 0.0
    %173 = vmatpush1.msra.mxu0 0.0
    %174 = vmatprep.subr.mxu0 0.0
    %175 = vmatpush1.msra.mxu0 0.0
    %176 = vmatprep.subr.mxu0 0.0
    %177 = vmatpush1.msra.mxu0 0.0
    %178 = vmatprep.subr.mxu0 0.0
    %179 = vmatpush1.msra.mxu0 0.0
    %180 = vmatprep.subr.mxu0 0.0
    %181 = vmatpush1.msra.mxu0 0.0
    %182 = vmatprep.subr.mxu0 0.0
    %183 = vmatpush1.msra.mxu0 0.0
    %184 = vmatprep.subr.mxu0 0.0
    %185 = vmatpush1.msra.mxu0 0.0
    %186 = vmatprep.subr.mxu0 0.0
    %187 = vmatpush1.msra.mxu0 0.0
    %188 = vmatprep.subr.mxu0 0.0
    %189 = vmatpush1.msra.mxu0 0.0
    %190 = vmatprep.subr.mxu0 0.0
    %191 = vmatpush1.msra.mxu0 0.0
    %192 = vmatprep.subr.mxu0 0.0
    %193 = vmatpush1.msra.mxu0 0.0
    %194 = vmatprep.subr.mxu0 0.0
    %195 = vmatpush1.msra.mxu0 0.0
    %196 = vmatprep.subr.mxu0 0.0
    %197 = vmatpush1.msra.mxu0 0.0
    %198 = vmatprep.subr.mxu0 0.0
    %199 = vmatpush1.msra.mxu0 0.0
    %200 = vmatprep.subr.mxu0 0.0
    %201 = vmatpush1.msra.mxu0 0.0
    %202 = vmatprep.subr.mxu0 0.0
    %203 = vmatpush1.msra.mxu0 0.0
    %204 = vmatprep.subr.mxu0 0.0
    %205 = vmatpush1.msra.mxu0 0.0
    %206 = vmatprep.subr.mxu0 0.0
    %207 = vmatpush1.msra.mxu0 0.0
    %208 = vmatprep.subr.mxu0 0.0
    %209 = vmatpush1.msra.mxu0 0.0
    %210 = vmatprep.subr.mxu0 0.0
    %211 = vmatpush1.msra.mxu0 0.0
    %212 = vmatprep.mubr.f32.mxu0 0.0
    %213 = vmatmul.mubr.f32.gmra.mrb[0].mxu0 %v143
    %v214 = vpop.f32.mrb[0].mxu0
    %v215 = vadd.f32 0.0, %v214
    %v216 = vpop.f32.mrb[0].mxu0
    %217 = vmatprep.mubr.f32.mxu0 0.0
    %218 = vmatmul.mubr.f32.gmra.mrb[0].mxu0 %v146
    %v219 = vpop.f32.mrb[0].mxu0
    %v220 = vadd.f32 0.0, %v219
    %v221 = vpop.f32.mrb[0].mxu0
    %222 = vdwg.mxu0
    %v223 = vld [vmem:[#allocation2] sm:$0xff]
    %v224 = vld [vmem:[#allocation2 + $0x8] sm:$0xff]
    %v225 = vld [vmem:[#allocation2 + $0x10] sm:$0xff]
    %v226 = vld [vmem:[#allocation2 + $0x18] sm:$0xff]
    %v227 = vld [vmem:[%s2] sm:$0x1]
    %v228 = vlaneseq
    %v229 = vshrl.u32 %v228, 7
    %v230 = vsub.s32 0, %v229
    %v231 = vrot.slane %v227, %v230
    %236 = vrot.lane.b32.xlu0 %v223, 72
    %v237 = vpop.permute.xlu0 %236
    %238 = vrot.lane.b32.xlu0 %v224, 72
    %v239 = vpop.permute.xlu0 %238
    %240 = vrot.lane.b32.xlu0 %v225, 72
    %v241 = vpop.permute.xlu0 %240
    %242 = vrot.lane.b32.xlu0 %v226, 72
    %v243 = vpop.permute.xlu0 %242
    %248 = vmatprep.subr.mxu0 0.0
    %249 = vmatpush1.msra.mxu0 %v237
    %250 = vmatprep.subr.mxu0 0.0
    %251 = vmatpush1.msra.mxu0 %v239
    %252 = vmatprep.subr.mxu0 0.0
    %253 = vmatpush1.msra.mxu0 %v241
    %254 = vmatprep.subr.mxu0 0.0
    %255 = vmatpush1.msra.mxu0 %v243
    %256 = vmatprep.subr.mxu0 0.0
    %257 = vmatpush1.msra.mxu0 0.0
    %258 = vmatprep.subr.mxu0 0.0
    %259 = vmatpush1.msra.mxu0 0.0
    %260 = vmatprep.subr.mxu0 0.0
    %261 = vmatpush1.msra.mxu0 0.0
    %262 = vmatprep.subr.mxu0 0.0
    %263 = vmatpush1.msra.mxu0 0.0
    %264 = vmatprep.subr.mxu0 0.0
    %265 = vmatpush1.msra.mxu0 0.0
    %266 = vmatprep.subr.mxu0 0.0
    %267 = vmatpush1.msra.mxu0 0.0
    %268 = vmatprep.subr.mxu0 0.0
    %269 = vmatpush1.msra.mxu0 0.0
    %270 = vmatprep.subr.mxu0 0.0
    %271 = vmatpush1.msra.mxu0 0.0
    %272 = vmatprep.subr.mxu0 0.0
    %273 = vmatpush1.msra.mxu0 0.0
    %274 = vmatprep.subr.mxu0 0.0
    %275 = vmatpush1.msra.mxu0 0.0
    %276 = vmatprep.subr.mxu0 0.0
    %277 = vmatpush1.msra.mxu0 0.0
    %278 = vmatprep.subr.mxu0 0.0
    %279 = vmatpush1.msra.mxu0 0.0
    %280 = vmatprep.subr.mxu0 0.0
    %281 = vmatpush1.msra.mxu0 0.0
    %282 = vmatprep.subr.mxu0 0.0
    %283 = vmatpush1.msra.mxu0 0.0
    %284 = vmatprep.subr.mxu0 0.0
    %285 = vmatpush1.msra.mxu0 0.0
    %286 = vmatprep.subr.mxu0 0.0
    %287 = vmatpush1.msra.mxu0 0.0
    %288 = vmatprep.subr.mxu0 0.0
    %289 = vmatpush1.msra.mxu0 0.0
    %290 = vmatprep.subr.mxu0 0.0
    %291 = vmatpush1.msra.mxu0 0.0
    %292 = vmatprep.subr.mxu0 0.0
    %293 = vmatpush1.msra.mxu0 0.0
    %294 = vmatprep.subr.mxu0 0.0
    %295 = vmatpush1.msra.mxu0 0.0
    %296 = vmatprep.subr.mxu0 0.0
    %297 = vmatpush1.msra.mxu0 0.0
    %298 = vmatprep.subr.mxu0 0.0
    %299 = vmatpush1.msra.mxu0 0.0
    %300 = vmatprep.subr.mxu0 0.0
    %301 = vmatpush1.msra.mxu0 0.0
    %302 = vmatprep.subr.mxu0 0.0
    %303 = vmatpush1.msra.mxu0 0.0
    %304 = vmatprep.subr.mxu0 0.0
    %305 = vmatpush1.msra.mxu0 0.0
    %306 = vmatprep.subr.mxu0 0.0
    %307 = vmatpush1.msra.mxu0 0.0
    %308 = vmatprep.subr.mxu0 0.0
    %309 = vmatpush1.msra.mxu0 0.0
    %310 = vmatprep.subr.mxu0 0.0
    %311 = vmatpush1.msra.mxu0 0.0
    %312 = vmatprep.mubr.f32.mxu0 0.0
    %313 = vmatmul.mubr.f32.gmra.mrb[0].mxu0 %v143
    %v314 = vpop.f32.mrb[0].mxu0
    %v315 = vadd.f32 %v231, %v314
    %v316 = vpop.f32.mrb[0].mxu0
    %317 = vmatprep.mubr.f32.mxu0 0.0
    %318 = vmatmul.mubr.f32.gmra.mrb[0].mxu0 %v146
    %v319 = vpop.f32.mrb[0].mxu0
    %v320 = vadd.f32 %v231, %v319
    %v321 = vpop.f32.mrb[0].mxu0
    %322 = vdwg.mxu0
    %v325 = vrot.slane %v315, 1
    %v326 = vrot.slane %v320, 1
    %327 = vrot.lane.b32.xlu0 %v325, 16
    %v328 = vpop.permute.xlu0 %327
    %329 = vrot.lane.b32.xlu0 %v326, 16
    %v330 = vpop.permute.xlu0 %329
    %v333 = vrot.slane %v315, 2
    %v334 = vrot.slane %v320, 2
    %335 = vrot.lane.b32.xlu0 %v333, 32
    %v336 = vpop.permute.xlu0 %335
    %337 = vrot.lane.b32.xlu0 %v334, 32
    %v338 = vpop.permute.xlu0 %337
    %v341 = vrot.slane %v315, 3
    %v342 = vrot.slane %v320, 3
    %343 = vrot.lane.b32.xlu0 %v341, 48
    %v344 = vpop.permute.xlu0 %343
    %345 = vrot.lane.b32.xlu0 %v342, 48
    %v346 = vpop.permute.xlu0 %345
    %v349 = vrot.slane %v315, 4
    %v350 = vrot.slane %v320, 4
    %351 = vrot.lane.b32.xlu0 %v349, 64
    %v352 = vpop.permute.xlu0 %351
    %353 = vrot.lane.b32.xlu0 %v350, 64
    %v354 = vpop.permute.xlu0 %353
    %v357 = vrot.slane %v315, 5
    %v358 = vrot.slane %v320, 5
    %359 = vrot.lane.b32.xlu0 %v357, 80
    %v360 = vpop.permute.xlu0 %359
    %361 = vrot.lane.b32.xlu0 %v358, 80
    %v362 = vpop.permute.xlu0 %361
    %v365 = vrot.slane %v315, 6
    %v366 = vrot.slane %v320, 6
    %367 = vrot.lane.b32.xlu0 %v365, 96
    %v368 = vpop.permute.xlu0 %367
    %369 = vrot.lane.b32.xlu0 %v366, 96
    %v370 = vpop.permute.xlu0 %369
    %v373 = vsel %vm55, %v315, %v328
    %v374 = vsel %vm55, %v320, %v330
    %v375 = vsel %vm141, %v373, %v336
    %v376 = vsel %vm141, %v374, %v338
    %vm377 = vcmask 392192
    %v378 = vsel %vm377, %v375, %v344
    %v379 = vsel %vm377, %v376, %v346
    %vm380 = vcmask 523264
    %v381 = vsel %vm380, %v378, %v352
    %v382 = vsel %vm380, %v379, %v354
    %vm383 = vcmask 654336
    %v384 = vsel %vm383, %v381, %v360
    %v385 = vsel %vm383, %v382, %v362
    %vm386 = vcmask 785408
    %v387 = vsel %vm386, %v384, %v368
    %v388 = vsel %vm386, %v385, %v370
    %v389 = vlaneseq
    %v390 = vshrl.u32 %v389, 7
    %v391 = vsub.s32 0, %v390
    %v392 = vrot.slane %v387, %v391
    %v393 = vlaneseq
    %v394 = vshrl.u32 %v393, 7
    %v395 = vsub.s32 0, %v394
    %v396 = vrot.slane %v388, %v395
    %v397 = vadd.f32 %v215, %v392
    %v398 = vadd.f32 %v220, %v396
    %v399 = vtanh.pop %v397
    %v400 = vtanh.pop %v398
    %v401 = vld [vmem:[#allocation2] sm:$0xff]
    %v402 = vld [vmem:[#allocation2 + $0x8] sm:$0xff]
    %v403 = vld [vmem:[#allocation2 + $0x10] sm:$0xff]
    %v404 = vld [vmem:[#allocation2 + $0x18] sm:$0xff]
    %v405 = vld [vmem:[#allocation2 + $0x20] sm:$0xff]
    %v406 = vld [vmem:[#allocation2 + $0x28] sm:$0xff]
    %v407 = vld [vmem:[#allocation2 + $0x30] sm:$0xff]
    %v408 = vld [vmem:[#allocation2 + $0x38] sm:$0xff]
    %v409 = vld [vmem:[#allocation2 + $0x40] sm:$0xff]
    %v410 = vld [vmem:[#allocation2 + $0x48] sm:$0xff]
    %v411 = vld [vmem:[#allocation2 + $0x50] sm:$0xff]
    %v412 = vld [vmem:[#allocation2 + $0x58] sm:$0xff]
    %v413 = vld [vmem:[#allocation2 + $0x60] sm:$0xff]
    %v414 = vld [vmem:[#allocation2 + $0x68] sm:$0xff]
    %429 = vrot.lane.b32.xlu0 %v401, 56
    %v430 = vpop.permute.xlu0 %429
    %431 = vrot.lane.b32.xlu0 %v402, 56
    %v432 = vpop.permute.xlu0 %431
    %433 = vrot.lane.b32.xlu0 %v403, 56
    %v434 = vpop.permute.xlu0 %433
    %435 = vrot.lane.b32.xlu0 %v404, 56
    %v436 = vpop.permute.xlu0 %435
    %437 = vrot.lane.b32.xlu0 %v405, 56
    %v438 = vpop.permute.xlu0 %437
    %439 = vrot.lane.b32.xlu0 %v406, 56
    %v440 = vpop.permute.xlu0 %439
    %441 = vrot.lane.b32.xlu0 %v407, 56
    %v442 = vpop.permute.xlu0 %441
    %443 = vrot.lane.b32.xlu0 %v408, 56
    %v444 = vpop.permute.xlu0 %443
    %445 = vrot.lane.b32.xlu0 %v409, 56
    %v446 = vpop.permute.xlu0 %445
    %447 = vrot.lane.b32.xlu0 %v410, 56
    %v448 = vpop.permute.xlu0 %447
    %449 = vrot.lane.b32.xlu0 %v411, 56
    %v450 = vpop.permute.xlu0 %449
    %451 = vrot.lane.b32.xlu0 %v412, 56
    %v452 = vpop.permute.xlu0 %451
    %453 = vrot.lane.b32.xlu0 %v413, 56
    %v454 = vpop.permute.xlu0 %453
    %455 = vrot.lane.b32.xlu0 %v414, 56
    %v456 = vpop.permute.xlu0 %455
    %vm471 = vcmask 916480
    %v473 = vsel %vm471, %v399, 0
    %v476 = vsel %vm471, %v400, 0
    %478 = vmatprep.subr.mxu0 0.0
    %479 = vmatpush1.msra.mxu0 %v430
    %480 = vmatprep.subr.mxu0 0.0
    %481 = vmatpush1.msra.mxu0 %v432
    %482 = vmatprep.subr.mxu0 0.0
    %483 = vmatpush1.msra.mxu0 %v434
    %484 = vmatprep.subr.mxu0 0.0
    %485 = vmatpush1.msra.mxu0 %v436
    %486 = vmatprep.subr.mxu0 0.0
    %487 = vmatpush1.msra.mxu0 %v438
    %488 = vmatprep.subr.mxu0 0.0
    %489 = vmatpush1.msra.mxu0 %v440
    %490 = vmatprep.subr.mxu0 0.0
    %491 = vmatpush1.msra.mxu0 %v442
    %492 = vmatprep.subr.mxu0 0.0
    %493 = vmatpush1.msra.mxu0 %v444
    %494 = vmatprep.subr.mxu0 0.0
    %495 = vmatpush1.msra.mxu0 %v446
    %496 = vmatprep.subr.mxu0 0.0
    %497 = vmatpush1.msra.mxu0 %v448
    %498 = vmatprep.subr.mxu0 0.0
    %499 = vmatpush1.msra.mxu0 %v450
    %500 = vmatprep.subr.mxu0 0.0
    %501 = vmatpush1.msra.mxu0 %v452
    %502 = vmatprep.subr.mxu0 0.0
    %503 = vmatpush1.msra.mxu0 %v454
    %504 = vmatprep.subr.mxu0 0.0
    %505 = vmatpush1.msra.mxu0 %v456
    %506 = vmatprep.subr.mxu0 0.0
    %507 = vmatpush1.msra.mxu0 0.0
    %508 = vmatprep.subr.mxu0 0.0
    %509 = vmatpush1.msra.mxu0 0.0
    %510 = vmatprep.subr.mxu0 0.0
    %511 = vmatpush1.msra.mxu0 0.0
    %512 = vmatprep.subr.mxu0 0.0
    %513 = vmatpush1.msra.mxu0 0.0
    %514 = vmatprep.subr.mxu0 0.0
    %515 = vmatpush1.msra.mxu0 0.0
    %516 = vmatprep.subr.mxu0 0.0
    %517 = vmatpush1.msra.mxu0 0.0
    %518 = vmatprep.subr.mxu0 0.0
    %519 = vmatpush1.msra.mxu0 0.0
    %520 = vmatprep.subr.mxu0 0.0
    %521 = vmatpush1.msra.mxu0 0.0
    %522 = vmatprep.subr.mxu0 0.0
    %523 = vmatpush1.msra.mxu0 0.0
    %524 = vmatprep.subr.mxu0 0.0
    %525 = vmatpush1.msra.mxu0 0.0
    %526 = vmatprep.subr.mxu0 0.0
    %527 = vmatpush1.msra.mxu0 0.0
    %528 = vmatprep.subr.mxu0 0.0
    %529 = vmatpush1.msra.mxu0 0.0
    %530 = vmatprep.subr.mxu0 0.0
    %531 = vmatpush1.msra.mxu0 0.0
    %532 = vmatprep.subr.mxu0 0.0
    %533 = vmatpush1.msra.mxu0 0.0
    %534 = vmatprep.subr.mxu0 0.0
    %535 = vmatpush1.msra.mxu0 0.0
    %536 = vmatprep.subr.mxu0 0.0
    %537 = vmatpush1.msra.mxu0 0.0
    %538 = vmatprep.subr.mxu0 0.0
    %539 = vmatpush1.msra.mxu0 0.0
    %540 = vmatprep.subr.mxu0 0.0
    %541 = vmatpush1.msra.mxu0 0.0
    %542 = vmatprep.mubr.f32.mxu0 0.0
    %543 = vmatmul.mubr.f32.gmra.mrb[0].mxu0 %v473
    %v544 = vpop.f32.mrb[0].mxu0
    %v545 = vadd.f32 0.0, %v544
    %v546 = vpop.f32.mrb[0].mxu0
    %547 = vmatprep.mubr.f32.mxu0 0.0
    %548 = vmatmul.mubr.f32.gmra.mrb[0].mxu0 %v476
    %v549 = vpop.f32.mrb[0].mxu0
    %v550 = vadd.f32 0.0, %v549
    %v551 = vpop.f32.mrb[0].mxu0
    %552 = vdwg.mxu0
    %v553 = vld [vmem:[%s2] sm:$0xff]
    %556 = vrot.lane.b32.xlu0 %v545, 16
    %v557 = vpop.permute.xlu0 %556
    %558 = vrot.lane.b32.xlu0 %v550, 16
    %v559 = vpop.permute.xlu0 %558
    %v562 = vmul.f32 %v553, %v557
    %v563 = vmul.f32 %v553, %v559
    %565 = vrot.lane.b32.xlu0 %v553, 121
    %v566 = vpop.permute.xlu0 %565
    %v568 = vadd.f32 %v562, %v566
    %v569 = vadd.f32 %v563, %v566
    %vm570 = vcmask 187520
    %v571 = vsel %vm570, %v568, -inf
    %572 = vmax.xlane.f32.xlu0 %v571
    %v573 = vpop.xlane.xlu0 %572
    %v574 = vsel %vm570, %v569, -inf
    %575 = vmax.xlane.f32.xlu0 %v574
    %v576 = vpop.xlane.xlu0 %575
    %v577 = vsub.f32 %v568, %v573
    %v578 = vsub.f32 %v569, %v576
    %v579 = vmul.f32 %v577, 1.442695
    %v580 = vpow.pop %v579
    %v581 = vmul.f32 %v578, 1.442695
    %v582 = vpow.pop %v581
    %585 = vrot.lane.b32.xlu0 %v580, 112
    %v586 = vpop.permute.xlu0 %585
    %587 = vrot.lane.b32.xlu0 %v582, 112
    %v588 = vpop.permute.xlu0 %587
    %vm591 = vcmask 56320
    %v592 = vsel %vm591, %v586, 0.0
    %593 = vadd.xlane.f32.xlu0 %v592
    %v594 = vpop.xlane.xlu0 %593
    %v595 = vsel %vm591, %v588, 0.0
    %596 = vadd.xlane.f32.xlu0 %v595
    %v597 = vpop.xlane.xlu0 %596
    %v598 = vrcp.pop %v594
    %v599 = vmul.f32 %v580, %v598
    %v600 = vrcp.pop %v597
    %v601 = vmul.f32 %v582, %v600
    %602 = vrot.lane.b32.xlu0 %v553, 114
    %v603 = vpop.permute.xlu0 %602
    %v605 = vmul.f32 %v599, %v603
    %v606 = vmul.f32 %v601, %v603
    %v607 = vrot.slane %v129, 7
    %v608 = vrot.slane %v134, 7
    %v611 = vsub.f32 %v129, %v607
    %v612 = vsub.f32 %v134, %v608
    %614 = vset.pattern.permute.xlu0 16
    %615 = vperm.xlu0 %614, %v599
    %v616 = vpop.permute.xlu0 %615
    %619 = vset.pattern.permute.xlu0 16
    %620 = vperm.xlu0 %619, %v601
    %v621 = vpop.permute.xlu0 %620
    %v623 = vlaneseq
    %v624 = vshrl.u32 %v623, 7
    %v625 = vsub.s32 0, %v624
    %v626 = vrot.slane %v129, %v625
    %v627 = vlaneseq
    %v628 = vshrl.u32 %v627, 7
    %v629 = vsub.s32 0, %v628
    %v630 = vrot.slane %v134, %v629
    %v631 = vmul.f32 %v616, %v626
    %v632 = vmul.f32 %v621, %v630
    %v633 = vadd.f32 %v631, 0.0
    %v634 = vadd.f32 %v632, 0.0
    %636 = vset.pattern.permute.xlu0 16
    %637 = vperm.xlu0 %636, %v605
    %v638 = vpop.permute.xlu0 %637
    %641 = vset.pattern.permute.xlu0 16
    %642 = vperm.xlu0 %641, %v606
    %v643 = vpop.permute.xlu0 %642
    %v645 = vlaneseq
    %v646 = vshrl.u32 %v645, 7
    %v647 = vsub.s32 1, %v646
    %v648 = vrot.slane %v611, %v647
    %v649 = vlaneseq
    %v650 = vshrl.u32 %v649, 7
    %v651 = vsub.s32 1, %v650
    %v652 = vrot.slane %v612, %v651
    %v653 = vmul.f32 %v638, %v648
    %v654 = vmul.f32 %v643, %v652
    %v655 = vadd.f32 %v633, %v653
    %v656 = vadd.f32 %v634, %v654
    %657 = vset.pattern.permute.xlu0 17
    %658 = vperm.xlu0 %657, %v599
    %v659 = vpop.permute.xlu0 %658
    %661 = vset.pattern.permute.xlu0 17
    %662 = vperm.xlu0 %661, %v601
    %v663 = vpop.permute.xlu0 %662
    %v665 = vlaneseq
    %v666 = vshrl.u32 %v665, 7
    %v667 = vsub.s32 1, %v666
    %v668 = vrot.slane %v129, %v667
    %v669 = vlaneseq
    %v670 = vshrl.u32 %v669, 7
    %v671 = vsub.s32 1, %v670
    %v672 = vrot.slane %v134, %v671
    %v673 = vmul.f32 %v659, %v668
    %v674 = vmul.f32 %v663, %v672
    %v675 = vadd.f32 %v655, %v673
    %v676 = vadd.f32 %v656, %v674
    %677 = vset.pattern.permute.xlu0 17
    %678 = vperm.xlu0 %677, %v605
    %v679 = vpop.permute.xlu0 %678
    %681 = vset.pattern.permute.xlu0 17
    %682 = vperm.xlu0 %681, %v606
    %v683 = vpop.permute.xlu0 %682
    %v685 = vlaneseq
    %v686 = vshrl.u32 %v685, 7
    %v687 = vsub.s32 2, %v686
    %v688 = vrot.slane %v611, %v687
    %v689 = vlaneseq
    %v690 = vshrl.u32 %v689, 7
    %v691 = vsub.s32 2, %v690
    %v692 = vrot.slane %v612, %v691
    %v693 = vmul.f32 %v679, %v688
    %v694 = vmul.f32 %v683, %v692
    %v695 = vadd.f32 %v675, %v693
    %v696 = vadd.f32 %v676, %v694
    %697 = vset.pattern.permute.xlu0 18
    %698 = vperm.xlu0 %697, %v599
    %v699 = vpop.permute.xlu0 %698
    %701 = vset.pattern.permute.xlu0 18
    %702 = vperm.xlu0 %701, %v601
    %v703 = vpop.permute.xlu0 %702
    %v705 = vlaneseq
    %v706 = vshrl.u32 %v705, 7
    %v707 = vsub.s32 2, %v706
    %v708 = vrot.slane %v129, %v707
    %v709 = vlaneseq
    %v710 = vshrl.u32 %v709, 7
    %v711 = vsub.s32 2, %v710
    %v712 = vrot.slane %v134, %v711
    %v713 = vmul.f32 %v699, %v708
    %v714 = vmul.f32 %v703, %v712
    %v715 = vadd.f32 %v695, %v713
    %v716 = vadd.f32 %v696, %v714
    %717 = vset.pattern.permute.xlu0 18
    %718 = vperm.xlu0 %717, %v605
    %v719 = vpop.permute.xlu0 %718
    %721 = vset.pattern.permute.xlu0 18
    %722 = vperm.xlu0 %721, %v606
    %v723 = vpop.permute.xlu0 %722
    %v725 = vlaneseq
    %v726 = vshrl.u32 %v725, 7
    %v727 = vsub.s32 3, %v726
    %v728 = vrot.slane %v611, %v727
    %v729 = vlaneseq
    %v730 = vshrl.u32 %v729, 7
    %v731 = vsub.s32 3, %v730
    %v732 = vrot.slane %v612, %v731
    %v733 = vmul.f32 %v719, %v728
    %v734 = vmul.f32 %v723, %v732
    %v735 = vadd.f32 %v715, %v733
    %v736 = vadd.f32 %v716, %v734
    %737 = vset.pattern.permute.xlu0 19
    %738 = vperm.xlu0 %737, %v599
    %v739 = vpop.permute.xlu0 %738
    %741 = vset.pattern.permute.xlu0 19
    %742 = vperm.xlu0 %741, %v601
    %v743 = vpop.permute.xlu0 %742
    %v745 = vlaneseq
    %v746 = vshrl.u32 %v745, 7
    %v747 = vsub.s32 3, %v746
    %v748 = vrot.slane %v129, %v747
    %v749 = vlaneseq
    %v750 = vshrl.u32 %v749, 7
    %v751 = vsub.s32 3, %v750
    %v752 = vrot.slane %v134, %v751
    %v753 = vmul.f32 %v739, %v748
    %v754 = vmul.f32 %v743, %v752
    %v755 = vadd.f32 %v735, %v753
    %v756 = vadd.f32 %v736, %v754
    %757 = vset.pattern.permute.xlu0 19
    %758 = vperm.xlu0 %757, %v605
    %v759 = vpop.permute.xlu0 %758
    %761 = vset.pattern.permute.xlu0 19
    %762 = vperm.xlu0 %761, %v606
    %v763 = vpop.permute.xlu0 %762
    %v765 = vlaneseq
    %v766 = vshrl.u32 %v765, 7
    %v767 = vsub.s32 4, %v766
    %v768 = vrot.slane %v611, %v767
    %v769 = vlaneseq
    %v770 = vshrl.u32 %v769, 7
    %v771 = vsub.s32 4, %v770
    %v772 = vrot.slane %v612, %v771
    %v773 = vmul.f32 %v759, %v768
    %v774 = vmul.f32 %v763, %v772
    %v775 = vadd.f32 %v755, %v773
    %v776 = vadd.f32 %v756, %v774
    %777 = vset.pattern.permute.xlu0 20
    %778 = vperm.xlu0 %777, %v599
    %v779 = vpop.permute.xlu0 %778
    %781 = vset.pattern.permute.xlu0 20
    %782 = vperm.xlu0 %781, %v601
    %v783 = vpop.permute.xlu0 %782
    %v785 = vlaneseq
    %v786 = vshrl.u32 %v785, 7
    %v787 = vsub.s32 4, %v786
    %v788 = vrot.slane %v129, %v787
    %v789 = vlaneseq
    %v790 = vshrl.u32 %v789, 7
    %v791 = vsub.s32 4, %v790
    %v792 = vrot.slane %v134, %v791
    %v793 = vmul.f32 %v779, %v788
    %v794 = vmul.f32 %v783, %v792
    %v795 = vadd.f32 %v775, %v793
    %v796 = vadd.f32 %v776, %v794
    %797 = vset.pattern.permute.xlu0 20
    %798 = vperm.xlu0 %797, %v605
    %v799 = vpop.permute.xlu0 %798
    %801 = vset.pattern.permute.xlu0 20
    %802 = vperm.xlu0 %801, %v606
    %v803 = vpop.permute.xlu0 %802
    %v805 = vlaneseq
    %v806 = vshrl.u32 %v805, 7
    %v807 = vsub.s32 5, %v806
    %v808 = vrot.slane %v611, %v807
    %v809 = vlaneseq
    %v810 = vshrl.u32 %v809, 7
    %v811 = vsub.s32 5, %v810
    %v812 = vrot.slane %v612, %v811
    %v813 = vmul.f32 %v799, %v808
    %v814 = vmul.f32 %v803, %v812
    %v815 = vadd.f32 %v795, %v813
    %v816 = vadd.f32 %v796, %v814
    %817 = vset.pattern.permute.xlu0 21
    %818 = vperm.xlu0 %817, %v599
    %v819 = vpop.permute.xlu0 %818
    %821 = vset.pattern.permute.xlu0 21
    %822 = vperm.xlu0 %821, %v601
    %v823 = vpop.permute.xlu0 %822
    %v825 = vlaneseq
    %v826 = vshrl.u32 %v825, 7
    %v827 = vsub.s32 5, %v826
    %v828 = vrot.slane %v129, %v827
    %v829 = vlaneseq
    %v830 = vshrl.u32 %v829, 7
    %v831 = vsub.s32 5, %v830
    %v832 = vrot.slane %v134, %v831
    %v833 = vmul.f32 %v819, %v828
    %v834 = vmul.f32 %v823, %v832
    %v835 = vadd.f32 %v815, %v833
    %v836 = vadd.f32 %v816, %v834
    %837 = vset.pattern.permute.xlu0 21
    %838 = vperm.xlu0 %837, %v605
    %v839 = vpop.permute.xlu0 %838
    %841 = vset.pattern.permute.xlu0 21
    %842 = vperm.xlu0 %841, %v606
    %v843 = vpop.permute.xlu0 %842
    %v845 = vlaneseq
    %v846 = vshrl.u32 %v845, 7
    %v847 = vsub.s32 6, %v846
    %v848 = vrot.slane %v611, %v847
    %v849 = vlaneseq
    %v850 = vshrl.u32 %v849, 7
    %v851 = vsub.s32 6, %v850
    %v852 = vrot.slane %v612, %v851
    %v853 = vmul.f32 %v839, %v848
    %v854 = vmul.f32 %v843, %v852
    %v855 = vadd.f32 %v835, %v853
    %v856 = vadd.f32 %v836, %v854
    %857 = vset.pattern.permute.xlu0 22
    %858 = vperm.xlu0 %857, %v599
    %v859 = vpop.permute.xlu0 %858
    %861 = vset.pattern.permute.xlu0 22
    %862 = vperm.xlu0 %861, %v601
    %v863 = vpop.permute.xlu0 %862
    %v865 = vlaneseq
    %v866 = vshrl.u32 %v865, 7
    %v867 = vsub.s32 6, %v866
    %v868 = vrot.slane %v129, %v867
    %v869 = vlaneseq
    %v870 = vshrl.u32 %v869, 7
    %v871 = vsub.s32 6, %v870
    %v872 = vrot.slane %v134, %v871
    %v873 = vmul.f32 %v859, %v868
    %v874 = vmul.f32 %v863, %v872
    %v875 = vadd.f32 %v855, %v873
    %v876 = vadd.f32 %v856, %v874
    %877 = vset.pattern.permute.xlu0 22
    %878 = vperm.xlu0 %877, %v605
    %v879 = vpop.permute.xlu0 %878
    %881 = vset.pattern.permute.xlu0 22
    %882 = vperm.xlu0 %881, %v606
    %v883 = vpop.permute.xlu0 %882
    %v885 = vlaneseq
    %v886 = vshrl.u32 %v885, 7
    %v887 = vsub.s32 7, %v886
    %v888 = vrot.slane %v611, %v887
    %v889 = vlaneseq
    %v890 = vshrl.u32 %v889, 7
    %v891 = vsub.s32 7, %v890
    %v892 = vrot.slane %v612, %v891
    %v893 = vmul.f32 %v879, %v888
    %v894 = vmul.f32 %v883, %v892
    %v895 = vadd.f32 %v875, %v893
    %v896 = vadd.f32 %v876, %v894
    %899 = vrot.lane.b32.xlu0 %v895, 32
    %v900 = vpop.permute.xlu0 %899
    %901 = vrot.lane.b32.xlu0 %v896, 32
    %v902 = vpop.permute.xlu0 %901
    %v905 = vsel %vm141, %v129, %v900
    %v906 = vsel %vm141, %v134, %v902
    %vm910 = vcmask 1046528
    %v911 = vrot.slane %v905, 1
    %v912 = vrot.slane 0.0, 1
    %v913 = vsel %vm910, %v911, %v912
    %v914 = vrot.slane %v906, 1
    %v915 = vsel %vm910, %v914, %v912
    %916 = vrot.lane.b32.xlu0 %v913, 64
    %v917 = vpop.permute.xlu0 %916
    %918 = vrot.lane.b32.xlu0 %v915, 64
    %v919 = vpop.permute.xlu0 %918
    %vm922 = vcmask 1045504
    %v923 = vrot.slane %v905, 2
    %v924 = vrot.slane 0.0, 2
    %v925 = vsel %vm922, %v923, %v924
    %v926 = vrot.slane %v906, 2
    %v927 = vsel %vm922, %v926, %v924
    %vm930 = vcmask 1044480
    %v931 = vrot.slane %v905, 3
    %v932 = vrot.slane 0.0, 3
    %v933 = vsel %vm930, %v931, %v932
    %v934 = vrot.slane %v906, 3
    %v935 = vsel %vm930, %v934, %v932
    %936 = vrot.lane.b32.xlu0 %v933, 64
    %v937 = vpop.permute.xlu0 %936
    %938 = vrot.lane.b32.xlu0 %v935, 64
    %v939 = vpop.permute.xlu0 %938
    %vm942 = vcmask 1043456
    %v943 = vrot.slane %v905, 4
    %v944 = vrot.slane 0.0, 4
    %v945 = vsel %vm942, %v943, %v944
    %v946 = vrot.slane %v906, 4
    %v947 = vsel %vm942, %v946, %v944
    %v948 = vsel %vm380, %v905, %v917
    %v949 = vsel %vm380, %v906, %v919
    %v950 = vsel %vm380, %v925, %v937
    %v951 = vsel %vm380, %v927, %v939
    %v952 = vld [vmem:[#allocation2] sm:$0xff]
    %v953 = vld [vmem:[#allocation2 + $0x8] sm:$0xff]
    %v954 = vld [vmem:[#allocation2 + $0x10] sm:$0xff]
    %v955 = vld [vmem:[#allocation2 + $0x18] sm:$0xff]
    %v956 = vld [vmem:[#allocation2 + $0x20] sm:$0xff]
    %v957 = vld [vmem:[#allocation2 + $0x28] sm:$0xff]
    %v958 = vld [vmem:[#allocation2 + $0x30] sm:$0xff]
    %v959 = vld [vmem:[#allocation2 + $0x38] sm:$0xff]
    %v960 = vld [vmem:[#allocation2 + $0x40] sm:$0xff]
    %v961 = vld [vmem:[#allocation2 + $0x48] sm:$0xff]
    %v962 = vld [vmem:[#allocation2 + $0x50] sm:$0xff]
    %v963 = vld [vmem:[#allocation2 + $0x58] sm:$0xff]
    %v964 = vld [vmem:[#allocation2 + $0x60] sm:$0xff]
    %v965 = vld [vmem:[#allocation2 + $0x68] sm:$0xff]
    %v966 = vld [vmem:[#allocation2 + $0x70] sm:$0xff]
    %v967 = vld [vmem:[#allocation2 + $0x78] sm:$0xff]
    %v968 = vld [vmem:[#allocation2 + $0x80] sm:$0xff]
    %v969 = vld [vmem:[#allocation2 + $0x88] sm:$0xff]
    %v970 = vld [vmem:[#allocation2 + $0x90] sm:$0xff]
    %v971 = vld [vmem:[#allocation2 + $0x98] sm:$0xff]
    %v972 = vld [vmem:[#allocation2 + $0xa0] sm:$0xff]
    %v973 = vld [vmem:[#allocation2 + $0xa8] sm:$0xff]
    %v974 = vld [vmem:[#allocation2 + $0xb0] sm:$0xff]
    %v975 = vld [vmem:[#allocation2 + $0xb8] sm:$0xff]
    %v976 = vld [vmem:[#allocation2 + $0xc0] sm:$0xff]
    %v977 = vld [vmem:[#allocation2 + $0xc8] sm:$0xff]
    %v978 = vld [vmem:[#allocation2 + $0xd0] sm:$0xff]
    %v979 = vld [vmem:[#allocation2 + $0xd8] sm:$0xff]
    %v980 = vld [vmem:[#allocation2 + $0xe0] sm:$0xff]
    %v981 = vld [vmem:[#allocation2 + $0xe8] sm:$0xff]
    %v982 = vld [vmem:[#allocation2 + $0xf0] sm:$0xff]
    %v983 = vld [vmem:[#allocation2 + $0xf8] sm:$0xff]
    %v984 = vld [vmem:[#allocation2 + $0x100] sm:$0xff]
    %v985 = vld [vmem:[#allocation2 + $0x108] sm:$0xff]
    %v986 = vld [vmem:[#allocation2 + $0x110] sm:$0xff]
    %v987 = vld [vmem:[#allocation2 + $0x118] sm:$0xff]
    %v988 = vld [vmem:[#allocation2 + $0x120] sm:$0xff]
    %v989 = vld [vmem:[#allocation2 + $0x128] sm:$0xff]
    %v990 = vld [vmem:[#allocation2 + $0x130] sm:$0xff]
    %v991 = vld [vmem:[#allocation2 + $0x138] sm:$0xff]
    %v992 = vsel %vm380, %v945, 0
    %v994 = vsel %vm380, %v947, 0
    %996 = vmatprep.subr.mxu0 0.0
    %997 = vmatpush1.msra.mxu0 %v952
    %998 = vmatprep.subr.mxu0 0.0
    %999 = vmatpush1.msra.mxu0 %v953
    %1000 = vmatprep.subr.mxu0 0.0
    %1001 = vmatpush1.msra.mxu0 %v954
    %1002 = vmatprep.subr.mxu0 0.0
    %1003 = vmatpush1.msra.mxu0 %v955
    %1004 = vmatprep.subr.mxu0 0.0
    %1005 = vmatpush1.msra.mxu0 %v956
    %1006 = vmatprep.subr.mxu0 0.0
    %1007 = vmatpush1.msra.mxu0 %v957
    %1008 = vmatprep.subr.mxu0 0.0
    %1009 = vmatpush1.msra.mxu0 %v958
    %1010 = vmatprep.subr.mxu0 0.0
    %1011 = vmatpush1.msra.mxu0 %v959
    %1012 = vmatprep.subr.mxu0 0.0
    %1013 = vmatpush1.msra.mxu0 %v960
    %1014 = vmatprep.subr.mxu0 0.0
    %1015 = vmatpush1.msra.mxu0 %v961
    %1016 = vmatprep.subr.mxu0 0.0
    %1017 = vmatpush1.msra.mxu0 %v962
    %1018 = vmatprep.subr.mxu0 0.0
    %1019 = vmatpush1.msra.mxu0 %v963
    %1020 = vmatprep.subr.mxu0 0.0
    %1021 = vmatpush1.msra.mxu0 %v964
    %1022 = vmatprep.subr.mxu0 0.0
    %1023 = vmatpush1.msra.mxu0 %v965
    %1024 = vmatprep.subr.mxu0 0.0
    %1025 = vmatpush1.msra.mxu0 %v966
    %1026 = vmatprep.subr.mxu0 0.0
    %1027 = vmatpush1.msra.mxu0 %v967
    %1028 = vmatprep.subr.mxu0 0.0
    %1029 = vmatpush1.msra.mxu0 %v968
    %1030 = vmatprep.subr.mxu0 0.0
    %1031 = vmatpush1.msra.mxu0 %v969
    %1032 = vmatprep.subr.mxu0 0.0
    %1033 = vmatpush1.msra.mxu0 %v970
    %1034 = vmatprep.subr.mxu0 0.0
    %1035 = vmatpush1.msra.mxu0 %v971
    %1036 = vmatprep.subr.mxu0 0.0
    %1037 = vmatpush1.msra.mxu0 %v972
    %1038 = vmatprep.subr.mxu0 0.0
    %1039 = vmatpush1.msra.mxu0 %v973
    %1040 = vmatprep.subr.mxu0 0.0
    %1041 = vmatpush1.msra.mxu0 %v974
    %1042 = vmatprep.subr.mxu0 0.0
    %1043 = vmatpush1.msra.mxu0 %v975
    %1044 = vmatprep.subr.mxu0 0.0
    %1045 = vmatpush1.msra.mxu0 %v976
    %1046 = vmatprep.subr.mxu0 0.0
    %1047 = vmatpush1.msra.mxu0 %v977
    %1048 = vmatprep.subr.mxu0 0.0
    %1049 = vmatpush1.msra.mxu0 %v978
    %1050 = vmatprep.subr.mxu0 0.0
    %1051 = vmatpush1.msra.mxu0 %v979
    %1052 = vmatprep.subr.mxu0 0.0
    %1053 = vmatpush1.msra.mxu0 %v980
    %1054 = vmatprep.subr.mxu0 0.0
    %1055 = vmatpush1.msra.mxu0 %v981
    %1056 = vmatprep.subr.mxu0 0.0
    %1057 = vmatpush1.msra.mxu0 %v982
    %1058 = vmatprep.subr.mxu0 0.0
    %1059 = vmatpush1.msra.mxu0 %v983
    %1060 = vmatprep.mubr.f32.mxu0 %v950
    %1061 = vmatmul.mubr.f32.gmra.mrb[0].mxu0 %v948
    %v1062 = vpop.f32.mrb[0].mxu0
    %v1063 = vadd.f32 0.0, %v1062
    %v1064 = vpop.f32.mrb[0].mxu0
    %1065 = vmatprep.mubr.f32.mxu0 %v951
    %1066 = vmatmul.mubr.f32.gmra.mrb[0].mxu0 %v949
    %v1067 = vpop.f32.mrb[0].mxu0
    %v1068 = vadd.f32 0.0, %v1067
    %v1069 = vpop.f32.mrb[0].mxu0
    %1070 = vdwg.mxu0
    %1071 = vmatprep.subr.mxu0 0.0
    %1072 = vmatpush1.msra.mxu0 %v984
    %1073 = vmatprep.subr.mxu0 0.0
    %1074 = vmatpush1.msra.mxu0 %v985
    %1075 = vmatprep.subr.mxu0 0.0
    %1076 = vmatpush1.msra.mxu0 %v986
    %1077 = vmatprep.subr.mxu0 0.0
    %1078 = vmatpush1.msra.mxu0 %v987
    %1079 = vmatprep.subr.mxu0 0.0
    %1080 = vmatpush1.msra.mxu0 %v988
    %1081 = vmatprep.subr.mxu0 0.0
    %1082 = vmatpush1.msra.mxu0 %v989
    %1083 = vmatprep.subr.mxu0 0.0
    %1084 = vmatpush1.msra.mxu0 %v990
    %1085 = vmatprep.subr.mxu0 0.0
    %1086 = vmatpush1.msra.mxu0 %v991
    %1087 = vmatprep.subr.mxu0 0.0
    %1088 = vmatpush1.msra.mxu0 0.0
    %1089 = vmatprep.subr.mxu0 0.0
    %1090 = vmatpush1.msra.mxu0 0.0
    %1091 = vmatprep.subr.mxu0 0.0
    %1092 = vmatpush1.msra.mxu0 0.0
    %1093 = vmatprep.subr.mxu0 0.0
    %1094 = vmatpush1.msra.mxu0 0.0
    %1095 = vmatprep.subr.mxu0 0.0
    %1096 = vmatpush1.msra.mxu0 0.0
    %1097 = vmatprep.subr.mxu0 0.0
    %1098 = vmatpush1.msra.mxu0 0.0
    %1099 = vmatprep.subr.mxu0 0.0
    %1100 = vmatpush1.msra.mxu0 0.0
    %1101 = vmatprep.subr.mxu0 0.0
    %1102 = vmatpush1.msra.mxu0 0.0
    %1103 = vmatprep.subr.mxu0 0.0
    %1104 = vmatpush1.msra.mxu0 0.0
    %1105 = vmatprep.subr.mxu0 0.0
    %1106 = vmatpush1.msra.mxu0 0.0
    %1107 = vmatprep.subr.mxu0 0.0
    %1108 = vmatpush1.msra.mxu0 0.0
    %1109 = vmatprep.subr.mxu0 0.0
    %1110 = vmatpush1.msra.mxu0 0.0
    %1111 = vmatprep.subr.mxu0 0.0
    %1112 = vmatpush1.msra.mxu0 0.0
    %1113 = vmatprep.subr.mxu0 0.0
    %1114 = vmatpush1.msra.mxu0 0.0
    %1115 = vmatprep.subr.mxu0 0.0
    %1116 = vmatpush1.msra.mxu0 0.0
    %1117 = vmatprep.subr.mxu0 0.0
    %1118 = vmatpush1.msra.mxu0 0.0
    %1119 = vmatprep.subr.mxu0 0.0
    %1120 = vmatpush1.msra.mxu0 0.0
    %1121 = vmatprep.subr.mxu0 0.0
    %1122 = vmatpush1.msra.mxu0 0.0
    %1123 = vmatprep.subr.mxu0 0.0
    %1124 = vmatpush1.msra.mxu0 0.0
    %1125 = vmatprep.subr.mxu0 0.0
    %1126 = vmatpush1.msra.mxu0 0.0
    %1127 = vmatprep.subr.mxu0 0.0
    %1128 = vmatpush1.msra.mxu0 0.0
    %1129 = vmatprep.subr.mxu0 0.0
    %1130 = vmatpush1.msra.mxu0 0.0
    %1131 = vmatprep.subr.mxu0 0.0
    %1132 = vmatpush1.msra.mxu0 0.0
    %1133 = vmatprep.subr.mxu0 0.0
    %1134 = vmatpush1.msra.mxu0 0.0
    %1135 = vmatprep.mubr.f32.mxu0 0.0
    %1136 = vmatmul.mubr.f32.gmra.mrb[0].mxu0 %v992
    %v1137 = vpop.f32.mrb[0].mxu0
    %v1138 = vadd.f32 %v1063, %v1137
    %v1139 = vpop.f32.mrb[0].mxu0
    %1140 = vmatprep.mubr.f32.mxu0 0.0
    %1141 = vmatmul.mubr.f32.gmra.mrb[0].mxu0 %v994
    %v1142 = vpop.f32.mrb[0].mxu0
    %v1143 = vadd.f32 %v1068, %v1142
    %v1144 = vpop.f32.mrb[0].mxu0
    %1145 = vdwg.mxu0
    %1146 = vrot.lane.b32.xlu0 %v553, 91
    %v1147 = vpop.permute.xlu0 %1146
    %v1149 = vadd.f32 %v1138, %v1147
    %v1150 = vadd.f32 %v1143, %v1147
    %vm1151 = vcmask 195584
    %v1152 = vsel %vm1151, %v1149, -inf
    %v1153 = vrot.slane %v1152, 4
    %v1154 = vmax.f32 %v1152, %v1153
    %v1155 = vrot.slane %v1154, 2
    %v1156 = vmax.f32 %v1154, %v1155
    %v1157 = vrot.slane %v1156, 1
    %v1158 = vmax.f32 %v1156, %v1157
    %v1159 = vsel %vm1151, %v1150, -inf
    %v1160 = vrot.slane %v1159, 4
    %v1161 = vmax.f32 %v1159, %v1160
    %v1162 = vrot.slane %v1161, 2
    %v1163 = vmax.f32 %v1161, %v1162
    %v1164 = vrot.slane %v1163, 1
    %v1165 = vmax.f32 %v1163, %v1164
    %v1166 = vld [vmem:[#allocation2 + $0x160] sm:$0xff]
    %v1167 = vld [vmem:[#allocation2 + $0x168] sm:$0xff]
    %v1168 = vld [vmem:[#allocation2 + $0x170] sm:$0xff]
    %v1169 = vld [vmem:[%s2 + $0x8] sm:$0x1]
    %v1170 = vlaneseq
    %v1171 = vshrl.u32 %v1170, 7
    %v1172 = vsub.s32 0, %v1171
    %v1173 = vrot.slane %v1169, %v1172
    %vm1176 = vcmask 1041409
    %v1177 = vsel %vm1176, %v1165, %v1158
    %v1178 = vsel %vm1151, %v1177, 0
    %1180 = vmatprep.subr.mxu0 0.0
    %1181 = vmatpush1.msra.mxu0 %v1166
    %1182 = vmatprep.subr.mxu0 0.0
    %1183 = vmatpush1.msra.mxu0 %v1167
    %1184 = vmatprep.subr.mxu0 0.0
    %1185 = vmatpush1.msra.mxu0 %v1168
    %1186 = vmatprep.subr.mxu0 0.0
    %1187 = vmatpush1.msra.mxu0 0.0
    %1188 = vmatprep.subr.mxu0 0.0
    %1189 = vmatpush1.msra.mxu0 0.0
    %1190 = vmatprep.subr.mxu0 0.0
    %1191 = vmatpush1.msra.mxu0 0.0
    %1192 = vmatprep.subr.mxu0 0.0
    %1193 = vmatpush1.msra.mxu0 0.0
    %1194 = vmatprep.subr.mxu0 0.0
    %1195 = vmatpush1.msra.mxu0 0.0
    %1196 = vmatprep.subr.mxu0 0.0
    %1197 = vmatpush1.msra.mxu0 0.0
    %1198 = vmatprep.subr.mxu0 0.0
    %1199 = vmatpush1.msra.mxu0 0.0
    %1200 = vmatprep.subr.mxu0 0.0
    %1201 = vmatpush1.msra.mxu0 0.0
    %1202 = vmatprep.subr.mxu0 0.0
    %1203 = vmatpush1.msra.mxu0 0.0
    %1204 = vmatprep.subr.mxu0 0.0
    %1205 = vmatpush1.msra.mxu0 0.0
    %1206 = vmatprep.subr.mxu0 0.0
    %1207 = vmatpush1.msra.mxu0 0.0
    %1208 = vmatprep.subr.mxu0 0.0
    %1209 = vmatpush1.msra.mxu0 0.0
    %1210 = vmatprep.subr.mxu0 0.0
    %1211 = vmatpush1.msra.mxu0 0.0
    %1212 = vmatprep.subr.mxu0 0.0
    %1213 = vmatpush1.msra.mxu0 0.0
    %1214 = vmatprep.subr.mxu0 0.0
    %1215 = vmatpush1.msra.mxu0 0.0
    %1216 = vmatprep.subr.mxu0 0.0
    %1217 = vmatpush1.msra.mxu0 0.0
    %1218 = vmatprep.subr.mxu0 0.0
    %1219 = vmatpush1.msra.mxu0 0.0
    %1220 = vmatprep.subr.mxu0 0.0
    %1221 = vmatpush1.msra.mxu0 0.0
    %1222 = vmatprep.subr.mxu0 0.0
    %1223 = vmatpush1.msra.mxu0 0.0
    %1224 = vmatprep.subr.mxu0 0.0
    %1225 = vmatpush1.msra.mxu0 0.0
    %1226 = vmatprep.subr.mxu0 0.0
    %1227 = vmatpush1.msra.mxu0 0.0
    %1228 = vmatprep.subr.mxu0 0.0
    %1229 = vmatpush1.msra.mxu0 0.0
    %1230 = vmatprep.subr.mxu0 0.0
    %1231 = vmatpush1.msra.mxu0 0.0
    %1232 = vmatprep.subr.mxu0 0.0
    %1233 = vmatpush1.msra.mxu0 0.0
    %1234 = vmatprep.subr.mxu0 0.0
    %1235 = vmatpush1.msra.mxu0 0.0
    %1236 = vmatprep.subr.mxu0 0.0
    %1237 = vmatpush1.msra.mxu0 0.0
    %1238 = vmatprep.subr.mxu0 0.0
    %1239 = vmatpush1.msra.mxu0 0.0
    %1240 = vmatprep.subr.mxu0 0.0
    %1241 = vmatpush1.msra.mxu0 0.0
    %1242 = vmatprep.subr.mxu0 0.0
    %1243 = vmatpush1.msra.mxu0 0.0
    %1244 = vmatprep.mubr.f32.mxu0 0.0
    %1245 = vmatmul.mubr.f32.gmra.mrb[0].mxu0 %v1178
    %v1246 = vpop.f32.mrb[0].mxu0
    %v1247 = vadd.f32 %v1173, %v1246
    %v1248 = vpop.f32.mrb[0].mxu0
    %1249 = vdwg.mxu0
    %vm1250 = vcmask 1041408
    %v1251 = vsel %vm1250, %v1247, -inf
    %1252 = vmax.xlane.f32.xlu0 %v1251
    %v1253 = vpop.xlane.xlu0 %1252
    %v1254 = vsub.f32 %v1247, %v1253
    %v1255 = vmul.f32 %v1254, 1.442695
    %v1256 = vpow.pop %v1255
    %v1257 = vsel %vm1250, %v1256, 0.0
    %1258 = vadd.xlane.f32.xlu0 %v1257
    %v1259 = vpop.xlane.xlu0 %1258
    %v1260 = vlog2.pop %v1259
    %v1261 = vmul.f32 %v1260, 0.6931472
    %v1262 = vsub.f32 %v1254, %v1261
    %1263 = vst [vmem:[#allocation5] sm:$0x3] %v1262
    // Predicated region
    $region18: #{_forward.1} parent=1 // pred_check
      _
    $region19: #{_forward.1} parent=1 // pred_check_branch
      %1265 = sbr.rel (0) target = $region21
    $region20: #{_forward.1} parent=1 // pred_region
      %s1267 = ssub.s32 32, 32
      %1268 = vsyncadd [#allocation4], %s1267
      %s1270 = sshll.u32 [#allocation5], 4
      %s1271 = int_to_ptr.vmem [resolvable:$true] %s1270
      %1273 = dma.vmem_to_hbm [thread:$0]  %s1271, 32, %s3, [#allocation4]
    $region21: #{_forward.1} parent=1 // pred_fallthru
      _
    // Predicated region
    $region22: #{_forward.1} parent=1 // pred_check
      _
    $region23: #{_forward.1} parent=1 // pred_check_branch
      %1275 = sbr.rel (0) target = $region25
    $region24: #{_forward.1} parent=1 // pred_region
      %1276 = dma.done [#allocation4], 32
    $region25: #{_forward.1} parent=1 // pred_fallthru
      _
    %1277 = vsyncpa [#allocation3], 1
    %1278 = vsyncpa [#allocation4], 1

</llo_original>
